<compile_context>
chip_gen: v7x
topology: tpu7x:2x2x1
jax: 0.10.0
libtpu: 0.0.40
codegen_flags: <defaults>
</compile_context>

<pallas_src>
import functools

import jax
import jax.numpy as jnp
from jax import lax
from jax.experimental import pallas as pl
from jax.experimental.pallas import tpu as pltpu

D_IN, D_HID, D_OUT = 5, 12, 3
SUB = 16                      # sublanes per compute strip (2 f32 vregs per feature)
DEFAULT_MAX_TILE_ROWS = 512   # 512 rows * 128 lanes = 64K batch elems per grid step


def _cdiv(a, b):
    return -(-a // b)


def _round_up(a, m):
    return _cdiv(a, m) * m


def _choose_tile_rows(rows, max_tile_rows):
    """rows is a multiple of SUB; pick tile_rows (multiple of SUB) dividing rows."""
    m = rows // SUB
    cap = max(max_tile_rows // SUB, 1)
    t = min(m, cap)
    while m % t:
        t -= 1
    # If everything would fit in one grid step, split it in two (when there is
    # enough work) so v7x's two TensorCores both get a tile; no-op on v5e/v6e.
    if t == m and m >= 4 and m % 2 == 0:
        t = m // 2
    return t * SUB


def mlp_kernel(x_ref, w1_ref, b1_ref, w2_ref, b2_ref, o_ref):
    # x_ref : (D_IN,  tile_rows, 128) VMEM  -- batch on (sublane, lane) axes
    # o_ref : (D_OUT, tile_rows, 128) VMEM
    # w1_ref: (D_HID, D_IN)  SMEM    b1_ref: (D_HID,)  SMEM
    # w2_ref: (D_OUT, D_HID) SMEM    b2_ref: (D_OUT,)  SMEM
    n_strips = x_ref.shape[1] // SUB

    def strip(s, carry):
        r0 = pl.multiple_of(s * SUB, SUB)
        # D_IN fully dense (SUB,128) slabs of the batch, one per input feature.
        xs = [x_ref[k, pl.ds(r0, SUB), :] for k in range(D_IN)]

        acc = [None] * D_OUT
        for j in range(D_HID):
            # h_j = relu(sum_k w1[j,k] * x_k + b1[j])  -- scalar-from-SMEM splats.
            h = xs[0] * w1_ref[j, 0]
            for k in range(1, D_IN):
                h = h + xs[k] * w1_ref[j, k]
            h = jnp.maximum(h + b1_ref[j], 0.0)
            # Fold h_j into the D_OUT accumulators immediately; h_j is then dead,
            # so the hidden activation never materializes in VMEM.
            for r in range(D_OUT):
                t = h * w2_ref[r, j]
                acc[r] = t if acc[r] is None else acc[r] + t

        for r in range(D_OUT):
            o_ref[r, pl.ds(r0, SUB), :] = (acc[r] + b2_ref[r]).astype(o_ref.dtype)
        return carry

    lax.fori_loop(0, n_strips, strip, 0)


def _forward(x, w1, b1, w2, b2, max_tile_rows):
    B = x.shape[0]
    # Pad the batch only to a multiple of SUB*128 = 2048 (<= 2047 junk elements),
    # never to the full tile size.
    rows = _round_up(_cdiv(max(B, 1), 128), SUB)
    Bp = rows * 128
    tile_rows = _choose_tile_rows(rows, max_tile_rows)
    grid = (rows // tile_rows,)

    # Batch-minor, fused pad (no zeros+set), then reshape to dense (8,128) slabs.
    # TODO(synk): for a large-B production path, take a batch-minor (5,B) input /
    # (3,B) output so these transposes disappear entirely instead of relying on
    # XLA fusion inside the surrounding jit.
    xt = jnp.pad(x.T.astype(jnp.float32), ((0, 0), (0, Bp - B)))
    xt = xt.reshape(D_IN, rows, 128)

    smem = pl.BlockSpec(memory_space=pltpu.MemorySpace.SMEM)
    out = pl.pallas_call(
        mlp_kernel,
        out_shape=jax.ShapeDtypeStruct((D_OUT, rows, 128), jnp.float32),
        grid=grid,
        in_specs=[
            pl.BlockSpec((D_IN, tile_rows, 128), lambda i: (0, i, 0)),  # streamed x
            smem,  # w1 (12, 5)   resident scalar table
            smem,  # b1 (12,)
            smem,  # w2 (3, 12)
            smem,  # b2 (3,)
        ],
        out_specs=pl.BlockSpec((D_OUT, tile_rows, 128), lambda i: (0, i, 0)),
        compiler_params=pltpu.CompilerParams(
            dimension_semantics=("parallel",)),
    )(
        xt,
        w1.astype(jnp.float32),
        b1.astype(jnp.float32),
        w2.astype(jnp.float32),
        b2.astype(jnp.float32),
    )
    return out.reshape(D_OUT, Bp)[:, :B].T


@functools.partial(jax.jit, static_argnames=("max_tile_rows",))
def mlp_5d_forward(x, w1, b1, w2, b2, max_tile_rows=DEFAULT_MAX_TILE_ROWS):
    """x: (B, 5); w1: (12, 5), b1: (12,), w2: (3, 12), b2: (3,)  (PyTorch layout).

    Returns (B, 3) = relu(x @ w1.T + b1) @ w2.T + b2.
    """
    if x.shape[0] == 0:
        return jnp.zeros((0, D_OUT), jnp.float32)
    return _forward(x, w1, b1, w2, b2, max_tile_rows)


def init_params(key):
    # Deterministic init mimicking PyTorch nn.Linear defaults:
    # U(-1/sqrt(fan_in), 1/sqrt(fan_in)); weights stored as (out, in) like PyTorch.
    k1, k2, k3, k4 = jax.random.split(key, 4)
    bound1 = 1.0 / jnp.sqrt(5.0)
    bound2 = 1.0 / jnp.sqrt(12.0)
    w1 = jax.random.uniform(k1, (D_HID, D_IN), jnp.float32, -bound1, bound1)
    b1 = jax.random.uniform(k2, (D_HID,), jnp.float32, -bound1, bound1)
    w2 = jax.random.uniform(k3, (D_OUT, D_HID), jnp.float32, -bound2, bound2)
    b2 = jax.random.uniform(k4, (D_OUT,), jnp.float32, -bound2, bound2)
    return w1, b1, w2, b2


def _reference(x, w1, b1, w2, b2):
    # Exact-f32 elementwise reference (avoids any matmul-precision ambiguity).
    h = jnp.maximum((x[:, None, :] * w1[None, :, :]).sum(-1) + b1, 0.0)
    return (h[:, None, :] * w2[None, :, :]).sum(-1) + b2


if __name__ == "__main__":
    key = jax.random.PRNGKey(0)
    k_x1, k_x2, k_x3, k_p = jax.random.split(key, 4)
    w1, b1, w2, b2 = init_params(k_p)

    # 1) Small, module-consistent batch: single-tile, single-strip path.
    x1 = jax.random.normal(k_x1, (8, D_IN), jnp.float32)
    o1 = jax.block_until_ready(mlp_5d_forward(x1, w1, b1, w2, b2))
    assert o1.shape == (8, D_OUT)
    assert jnp.allclose(o1, _reference(x1, w1, b1, w2, b2), atol=1e-5, rtol=1e-5)

    # 2) Non-aligned batch: exercises the 2048-padding + output slicing plumbing.
    x2 = jax.random.normal(k_x2, (1000, D_IN), jnp.float32)
    o2 = jax.block_until_ready(mlp_5d_forward(x2, w1, b1, w2, b2))
    assert o2.shape == (1000, D_OUT)
    assert jnp.allclose(o2, _reference(x2, w1, b1, w2, b2), atol=1e-5, rtol=1e-5)

    # 3) Same batch, default tile: one grid step with a multi-strip fori_loop.
    x3 = jax.random.normal(k_x3, (5000, D_IN), jnp.float32)
    o3 = jax.block_until_ready(mlp_5d_forward(x3, w1, b1, w2, b2))
    assert o3.shape == (5000, D_OUT)
    assert jnp.allclose(o3, _reference(x3, w1, b1, w2, b2), atol=1e-5, rtol=1e-5)

    # 4) Small tile cap: multi-step (pipelined, parallel) batch grid.
    o4 = jax.block_until_ready(
        mlp_5d_forward(x3, w1, b1, w2, b2, max_tile_rows=16))
    assert o4.shape == (5000, D_OUT)
    assert jnp.allclose(o4, _reference(x3, w1, b1, w2, b2), atol=1e-5, rtol=1e-5)

    print("KERNEL_OK")
</pallas_src>

<mosaic_0001>
module attributes {stable_mosaic.version = 11 : i64} {
  func.func @mlp_kernel(%arg0: i32, %arg1: memref<5x16x128xf32, #tpu.memory_space<vmem>>, %arg2: memref<12x5xf32, #tpu.memory_space<smem>>, %arg3: memref<12xf32, #tpu.memory_space<smem>>, %arg4: memref<3x12xf32, #tpu.memory_space<smem>>, %arg5: memref<3xf32, #tpu.memory_space<smem>>, %arg6: memref<3x16x128xf32, #tpu.memory_space<vmem>>) attributes {dimension_semantics = [#tpu.dimension_semantics<parallel>], iteration_bounds = array<i64: 1>, scalar_prefetch = 0 : i64, scratch_operands = 0 : i64, tpu.core_type = #tpu.core_type<tc>, window_params = [{transform_indices = @transform_0, window_bounds = array<i64: 5, 16, 128>}, {transform_indices = @transform_1, window_bounds = array<i64: 12, 5>}, {transform_indices = @transform_2, window_bounds = array<i64: 12>}, {transform_indices = @transform_3, window_bounds = array<i64: 3, 12>}, {transform_indices = @transform_4, window_bounds = array<i64: 3>}, {transform_indices = @transform_5, window_bounds = array<i64: 3, 16, 128>}]} {
    %c0_i32 = arith.constant 0 : i32
    %c16_i32 = arith.constant 16 : i32
    %0 = arith.muli %c0_i32, %c16_i32 : i32
    %1 = tpu.assume_multiple %0, 16 : i32
    %c0 = arith.constant 0 : index
    %2 = arith.index_cast %1 : i32 to index
    %c0_0 = arith.constant 0 : index
    %3 = vector.load %arg1[%c0, %2, %c0_0] : memref<5x16x128xf32, #tpu.memory_space<vmem>>, vector<1x16x128xf32>
    %4 = vector.shape_cast %3 : vector<1x16x128xf32> to vector<16x128xf32>
    %c1 = arith.constant 1 : index
    %5 = arith.index_cast %1 : i32 to index
    %c0_1 = arith.constant 0 : index
    %6 = vector.load %arg1[%c1, %5, %c0_1] : memref<5x16x128xf32, #tpu.memory_space<vmem>>, vector<1x16x128xf32>
    %7 = vector.shape_cast %6 : vector<1x16x128xf32> to vector<16x128xf32>
    %c2 = arith.constant 2 : index
    %8 = arith.index_cast %1 : i32 to index
    %c0_2 = arith.constant 0 : index
    %9 = vector.load %arg1[%c2, %8, %c0_2] : memref<5x16x128xf32, #tpu.memory_space<vmem>>, vector<1x16x128xf32>
    %10 = vector.shape_cast %9 : vector<1x16x128xf32> to vector<16x128xf32>
    %c3 = arith.constant 3 : index
    %11 = arith.index_cast %1 : i32 to index
    %c0_3 = arith.constant 0 : index
    %12 = vector.load %arg1[%c3, %11, %c0_3] : memref<5x16x128xf32, #tpu.memory_space<vmem>>, vector<1x16x128xf32>
    %13 = vector.shape_cast %12 : vector<1x16x128xf32> to vector<16x128xf32>
    %c4 = arith.constant 4 : index
    %14 = arith.index_cast %1 : i32 to index
    %c0_4 = arith.constant 0 : index
    %15 = vector.load %arg1[%c4, %14, %c0_4] : memref<5x16x128xf32, #tpu.memory_space<vmem>>, vector<1x16x128xf32>
    %16 = vector.shape_cast %15 : vector<1x16x128xf32> to vector<16x128xf32>
    %c0_5 = arith.constant 0 : index
    %c0_6 = arith.constant 0 : index
    %17 = memref.load %arg2[%c0_5, %c0_6] : memref<12x5xf32, #tpu.memory_space<smem>>
    %18 = vector.broadcast %17 : f32 to vector<16x128xf32>
    %19 = arith.mulf %4, %18 : vector<16x128xf32>
    %c0_7 = arith.constant 0 : index
    %c1_8 = arith.constant 1 : index
    %20 = memref.load %arg2[%c0_7, %c1_8] : memref<12x5xf32, #tpu.memory_space<smem>>
    %21 = vector.broadcast %20 : f32 to vector<16x128xf32>
    %22 = arith.mulf %7, %21 : vector<16x128xf32>
    %23 = arith.addf %19, %22 : vector<16x128xf32>
    %c0_9 = arith.constant 0 : index
    %c2_10 = arith.constant 2 : index
    %24 = memref.load %arg2[%c0_9, %c2_10] : memref<12x5xf32, #tpu.memory_space<smem>>
    %25 = vector.broadcast %24 : f32 to vector<16x128xf32>
    %26 = arith.mulf %10, %25 : vector<16x128xf32>
    %27 = arith.addf %23, %26 : vector<16x128xf32>
    %c0_11 = arith.constant 0 : index
    %c3_12 = arith.constant 3 : index
    %28 = memref.load %arg2[%c0_11, %c3_12] : memref<12x5xf32, #tpu.memory_space<smem>>
    %29 = vector.broadcast %28 : f32 to vector<16x128xf32>
    %30 = arith.mulf %13, %29 : vector<16x128xf32>
    %31 = arith.addf %27, %30 : vector<16x128xf32>
    %c0_13 = arith.constant 0 : index
    %c4_14 = arith.constant 4 : index
    %32 = memref.load %arg2[%c0_13, %c4_14] : memref<12x5xf32, #tpu.memory_space<smem>>
    %33 = vector.broadcast %32 : f32 to vector<16x128xf32>
    %34 = arith.mulf %16, %33 : vector<16x128xf32>
    %35 = arith.addf %31, %34 : vector<16x128xf32>
    %c0_15 = arith.constant 0 : index
    %36 = memref.load %arg3[%c0_15] : memref<12xf32, #tpu.memory_space<smem>>
    %37 = vector.broadcast %36 : f32 to vector<16x128xf32>
    %38 = arith.addf %35, %37 : vector<16x128xf32>
    %cst = arith.constant 0.000000e+00 : f32
    %39 = vector.broadcast %cst : f32 to vector<16x128xf32>
    %40 = arith.maximumf %38, %39 : vector<16x128xf32>
    %c0_16 = arith.constant 0 : index
    %c0_17 = arith.constant 0 : index
    %41 = memref.load %arg4[%c0_16, %c0_17] : memref<3x12xf32, #tpu.memory_space<smem>>
    %42 = vector.broadcast %41 : f32 to vector<16x128xf32>
    %43 = arith.mulf %40, %42 : vector<16x128xf32>
    %c1_18 = arith.constant 1 : index
    %c0_19 = arith.constant 0 : index
    %44 = memref.load %arg4[%c1_18, %c0_19] : memref<3x12xf32, #tpu.memory_space<smem>>
    %45 = vector.broadcast %44 : f32 to vector<16x128xf32>
    %46 = arith.mulf %40, %45 : vector<16x128xf32>
    %c2_20 = arith.constant 2 : index
    %c0_21 = arith.constant 0 : index
    %47 = memref.load %arg4[%c2_20, %c0_21] : memref<3x12xf32, #tpu.memory_space<smem>>
    %48 = vector.broadcast %47 : f32 to vector<16x128xf32>
    %49 = arith.mulf %40, %48 : vector<16x128xf32>
    %c1_22 = arith.constant 1 : index
    %c0_23 = arith.constant 0 : index
    %50 = memref.load %arg2[%c1_22, %c0_23] : memref<12x5xf32, #tpu.memory_space<smem>>
    %51 = vector.broadcast %50 : f32 to vector<16x128xf32>
    %52 = arith.mulf %4, %51 : vector<16x128xf32>
    %c1_24 = arith.constant 1 : index
    %c1_25 = arith.constant 1 : index
    %53 = memref.load %arg2[%c1_24, %c1_25] : memref<12x5xf32, #tpu.memory_space<smem>>
    %54 = vector.broadcast %53 : f32 to vector<16x128xf32>
    %55 = arith.mulf %7, %54 : vector<16x128xf32>
    %56 = arith.addf %52, %55 : vector<16x128xf32>
    %c1_26 = arith.constant 1 : index
    %c2_27 = arith.constant 2 : index
    %57 = memref.load %arg2[%c1_26, %c2_27] : memref<12x5xf32, #tpu.memory_space<smem>>
    %58 = vector.broadcast %57 : f32 to vector<16x128xf32>
    %59 = arith.mulf %10, %58 : vector<16x128xf32>
    %60 = arith.addf %56, %59 : vector<16x128xf32>
    %c1_28 = arith.constant 1 : index
    %c3_29 = arith.constant 3 : index
    %61 = memref.load %arg2[%c1_28, %c3_29] : memref<12x5xf32, #tpu.memory_space<smem>>
    %62 = vector.broadcast %61 : f32 to vector<16x128xf32>
    %63 = arith.mulf %13, %62 : vector<16x128xf32>
    %64 = arith.addf %60, %63 : vector<16x128xf32>
    %c1_30 = arith.constant 1 : index
    %c4_31 = arith.constant 4 : index
    %65 = memref.load %arg2[%c1_30, %c4_31] : memref<12x5xf32, #tpu.memory_space<smem>>
    %66 = vector.broadcast %65 : f32 to vector<16x128xf32>
    %67 = arith.mulf %16, %66 : vector<16x128xf32>
    %68 = arith.addf %64, %67 : vector<16x128xf32>
    %c1_32 = arith.constant 1 : index
    %69 = memref.load %arg3[%c1_32] : memref<12xf32, #tpu.memory_space<smem>>
    %70 = vector.broadcast %69 : f32 to vector<16x128xf32>
    %71 = arith.addf %68, %70 : vector<16x128xf32>
    %cst_33 = arith.constant 0.000000e+00 : f32
    %72 = vector.broadcast %cst_33 : f32 to vector<16x128xf32>
    %73 = arith.maximumf %71, %72 : vector<16x128xf32>
    %c0_34 = arith.constant 0 : index
    %c1_35 = arith.constant 1 : index
    %74 = memref.load %arg4[%c0_34, %c1_35] : memref<3x12xf32, #tpu.memory_space<smem>>
    %75 = vector.broadcast %74 : f32 to vector<16x128xf32>
    %76 = arith.mulf %73, %75 : vector<16x128xf32>
    %77 = arith.addf %43, %76 : vector<16x128xf32>
    %c1_36 = arith.constant 1 : index
    %c1_37 = arith.constant 1 : index
    %78 = memref.load %arg4[%c1_36, %c1_37] : memref<3x12xf32, #tpu.memory_space<smem>>
    %79 = vector.broadcast %78 : f32 to vector<16x128xf32>
    %80 = arith.mulf %73, %79 : vector<16x128xf32>
    %81 = arith.addf %46, %80 : vector<16x128xf32>
    %c2_38 = arith.constant 2 : index
    %c1_39 = arith.constant 1 : index
    %82 = memref.load %arg4[%c2_38, %c1_39] : memref<3x12xf32, #tpu.memory_space<smem>>
    %83 = vector.broadcast %82 : f32 to vector<16x128xf32>
    %84 = arith.mulf %73, %83 : vector<16x128xf32>
    %85 = arith.addf %49, %84 : vector<16x128xf32>
    %c2_40 = arith.constant 2 : index
    %c0_41 = arith.constant 0 : index
    %86 = memref.load %arg2[%c2_40, %c0_41] : memref<12x5xf32, #tpu.memory_space<smem>>
    %87 = vector.broadcast %86 : f32 to vector<16x128xf32>
    %88 = arith.mulf %4, %87 : vector<16x128xf32>
    %c2_42 = arith.constant 2 : index
    %c1_43 = arith.constant 1 : index
    %89 = memref.load %arg2[%c2_42, %c1_43] : memref<12x5xf32, #tpu.memory_space<smem>>
    %90 = vector.broadcast %89 : f32 to vector<16x128xf32>
    %91 = arith.mulf %7, %90 : vector<16x128xf32>
    %92 = arith.addf %88, %91 : vector<16x128xf32>
    %c2_44 = arith.constant 2 : index
    %c2_45 = arith.constant 2 : index
    %93 = memref.load %arg2[%c2_44, %c2_45] : memref<12x5xf32, #tpu.memory_space<smem>>
    %94 = vector.broadcast %93 : f32 to vector<16x128xf32>
    %95 = arith.mulf %10, %94 : vector<16x128xf32>
    %96 = arith.addf %92, %95 : vector<16x128xf32>
    %c2_46 = arith.constant 2 : index
    %c3_47 = arith.constant 3 : index
    %97 = memref.load %arg2[%c2_46, %c3_47] : memref<12x5xf32, #tpu.memory_space<smem>>
    %98 = vector.broadcast %97 : f32 to vector<16x128xf32>
    %99 = arith.mulf %13, %98 : vector<16x128xf32>
    %100 = arith.addf %96, %99 : vector<16x128xf32>
    %c2_48 = arith.constant 2 : index
    %c4_49 = arith.constant 4 : index
    %101 = memref.load %arg2[%c2_48, %c4_49] : memref<12x5xf32, #tpu.memory_space<smem>>
    %102 = vector.broadcast %101 : f32 to vector<16x128xf32>
    %103 = arith.mulf %16, %102 : vector<16x128xf32>
    %104 = arith.addf %100, %103 : vector<16x128xf32>
    %c2_50 = arith.constant 2 : index
    %105 = memref.load %arg3[%c2_50] : memref<12xf32, #tpu.memory_space<smem>>
    %106 = vector.broadcast %105 : f32 to vector<16x128xf32>
    %107 = arith.addf %104, %106 : vector<16x128xf32>
    %cst_51 = arith.constant 0.000000e+00 : f32
    %108 = vector.broadcast %cst_51 : f32 to vector<16x128xf32>
    %109 = arith.maximumf %107, %108 : vector<16x128xf32>
    %c0_52 = arith.constant 0 : index
    %c2_53 = arith.constant 2 : index
    %110 = memref.load %arg4[%c0_52, %c2_53] : memref<3x12xf32, #tpu.memory_space<smem>>
    %111 = vector.broadcast %110 : f32 to vector<16x128xf32>
    %112 = arith.mulf %109, %111 : vector<16x128xf32>
    %113 = arith.addf %77, %112 : vector<16x128xf32>
    %c1_54 = arith.constant 1 : index
    %c2_55 = arith.constant 2 : index
    %114 = memref.load %arg4[%c1_54, %c2_55] : memref<3x12xf32, #tpu.memory_space<smem>>
    %115 = vector.broadcast %114 : f32 to vector<16x128xf32>
    %116 = arith.mulf %109, %115 : vector<16x128xf32>
    %117 = arith.addf %81, %116 : vector<16x128xf32>
    %c2_56 = arith.constant 2 : index
    %c2_57 = arith.constant 2 : index
    %118 = memref.load %arg4[%c2_56, %c2_57] : memref<3x12xf32, #tpu.memory_space<smem>>
    %119 = vector.broadcast %118 : f32 to vector<16x128xf32>
    %120 = arith.mulf %109, %119 : vector<16x128xf32>
    %121 = arith.addf %85, %120 : vector<16x128xf32>
    %c3_58 = arith.constant 3 : index
    %c0_59 = arith.constant 0 : index
    %122 = memref.load %arg2[%c3_58, %c0_59] : memref<12x5xf32, #tpu.memory_space<smem>>
    %123 = vector.broadcast %122 : f32 to vector<16x128xf32>
    %124 = arith.mulf %4, %123 : vector<16x128xf32>
    %c3_60 = arith.constant 3 : index
    %c1_61 = arith.constant 1 : index
    %125 = memref.load %arg2[%c3_60, %c1_61] : memref<12x5xf32, #tpu.memory_space<smem>>
    %126 = vector.broadcast %125 : f32 to vector<16x128xf32>
    %127 = arith.mulf %7, %126 : vector<16x128xf32>
    %128 = arith.addf %124, %127 : vector<16x128xf32>
    %c3_62 = arith.constant 3 : index
    %c2_63 = arith.constant 2 : index
    %129 = memref.load %arg2[%c3_62, %c2_63] : memref<12x5xf32, #tpu.memory_space<smem>>
    %130 = vector.broadcast %129 : f32 to vector<16x128xf32>
    %131 = arith.mulf %10, %130 : vector<16x128xf32>
    %132 = arith.addf %128, %131 : vector<16x128xf32>
    %c3_64 = arith.constant 3 : index
    %c3_65 = arith.constant 3 : index
    %133 = memref.load %arg2[%c3_64, %c3_65] : memref<12x5xf32, #tpu.memory_space<smem>>
    %134 = vector.broadcast %133 : f32 to vector<16x128xf32>
    %135 = arith.mulf %13, %134 : vector<16x128xf32>
    %136 = arith.addf %132, %135 : vector<16x128xf32>
    %c3_66 = arith.constant 3 : index
    %c4_67 = arith.constant 4 : index
    %137 = memref.load %arg2[%c3_66, %c4_67] : memref<12x5xf32, #tpu.memory_space<smem>>
    %138 = vector.broadcast %137 : f32 to vector<16x128xf32>
    %139 = arith.mulf %16, %138 : vector<16x128xf32>
    %140 = arith.addf %136, %139 : vector<16x128xf32>
    %c3_68 = arith.constant 3 : index
    %141 = memref.load %arg3[%c3_68] : memref<12xf32, #tpu.memory_space<smem>>
    %142 = vector.broadcast %141 : f32 to vector<16x128xf32>
    %143 = arith.addf %140, %142 : vector<16x128xf32>
    %cst_69 = arith.constant 0.000000e+00 : f32
    %144 = vector.broadcast %cst_69 : f32 to vector<16x128xf32>
    %145 = arith.maximumf %143, %144 : vector<16x128xf32>
    %c0_70 = arith.constant 0 : index
    %c3_71 = arith.constant 3 : index
    %146 = memref.load %arg4[%c0_70, %c3_71] : memref<3x12xf32, #tpu.memory_space<smem>>
    %147 = vector.broadcast %146 : f32 to vector<16x128xf32>
    %148 = arith.mulf %145, %147 : vector<16x128xf32>
    %149 = arith.addf %113, %148 : vector<16x128xf32>
    %c1_72 = arith.constant 1 : index
    %c3_73 = arith.constant 3 : index
    %150 = memref.load %arg4[%c1_72, %c3_73] : memref<3x12xf32, #tpu.memory_space<smem>>
    %151 = vector.broadcast %150 : f32 to vector<16x128xf32>
    %152 = arith.mulf %145, %151 : vector<16x128xf32>
    %153 = arith.addf %117, %152 : vector<16x128xf32>
    %c2_74 = arith.constant 2 : index
    %c3_75 = arith.constant 3 : index
    %154 = memref.load %arg4[%c2_74, %c3_75] : memref<3x12xf32, #tpu.memory_space<smem>>
    %155 = vector.broadcast %154 : f32 to vector<16x128xf32>
    %156 = arith.mulf %145, %155 : vector<16x128xf32>
    %157 = arith.addf %121, %156 : vector<16x128xf32>
    %c4_76 = arith.constant 4 : index
    %c0_77 = arith.constant 0 : index
    %158 = memref.load %arg2[%c4_76, %c0_77] : memref<12x5xf32, #tpu.memory_space<smem>>
    %159 = vector.broadcast %158 : f32 to vector<16x128xf32>
    %160 = arith.mulf %4, %159 : vector<16x128xf32>
    %c4_78 = arith.constant 4 : index
    %c1_79 = arith.constant 1 : index
    %161 = memref.load %arg2[%c4_78, %c1_79] : memref<12x5xf32, #tpu.memory_space<smem>>
    %162 = vector.broadcast %161 : f32 to vector<16x128xf32>
    %163 = arith.mulf %7, %162 : vector<16x128xf32>
    %164 = arith.addf %160, %163 : vector<16x128xf32>
    %c4_80 = arith.constant 4 : index
    %c2_81 = arith.constant 2 : index
    %165 = memref.load %arg2[%c4_80, %c2_81] : memref<12x5xf32, #tpu.memory_space<smem>>
    %166 = vector.broadcast %165 : f32 to vector<16x128xf32>
    %167 = arith.mulf %10, %166 : vector<16x128xf32>
    %168 = arith.addf %164, %167 : vector<16x128xf32>
    %c4_82 = arith.constant 4 : index
    %c3_83 = arith.constant 3 : index
    %169 = memref.load %arg2[%c4_82, %c3_83] : memref<12x5xf32, #tpu.memory_space<smem>>
    %170 = vector.broadcast %169 : f32 to vector<16x128xf32>
    %171 = arith.mulf %13, %170 : vector<16x128xf32>
    %172 = arith.addf %168, %171 : vector<16x128xf32>
    %c4_84 = arith.constant 4 : index
    %c4_85 = arith.constant 4 : index
    %173 = memref.load %arg2[%c4_84, %c4_85] : memref<12x5xf32, #tpu.memory_space<smem>>
    %174 = vector.broadcast %173 : f32 to vector<16x128xf32>
    %175 = arith.mulf %16, %174 : vector<16x128xf32>
    %176 = arith.addf %172, %175 : vector<16x128xf32>
    %c4_86 = arith.constant 4 : index
    %177 = memref.load %arg3[%c4_86] : memref<12xf32, #tpu.memory_space<smem>>
    %178 = vector.broadcast %177 : f32 to vector<16x128xf32>
    %179 = arith.addf %176, %178 : vector<16x128xf32>
    %cst_87 = arith.constant 0.000000e+00 : f32
    %180 = vector.broadcast %cst_87 : f32 to vector<16x128xf32>
    %181 = arith.maximumf %179, %180 : vector<16x128xf32>
    %c0_88 = arith.constant 0 : index
    %c4_89 = arith.constant 4 : index
    %182 = memref.load %arg4[%c0_88, %c4_89] : memref<3x12xf32, #tpu.memory_space<smem>>
    %183 = vector.broadcast %182 : f32 to vector<16x128xf32>
    %184 = arith.mulf %181, %183 : vector<16x128xf32>
    %185 = arith.addf %149, %184 : vector<16x128xf32>
    %c1_90 = arith.constant 1 : index
    %c4_91 = arith.constant 4 : index
    %186 = memref.load %arg4[%c1_90, %c4_91] : memref<3x12xf32, #tpu.memory_space<smem>>
    %187 = vector.broadcast %186 : f32 to vector<16x128xf32>
    %188 = arith.mulf %181, %187 : vector<16x128xf32>
    %189 = arith.addf %153, %188 : vector<16x128xf32>
    %c2_92 = arith.constant 2 : index
    %c4_93 = arith.constant 4 : index
    %190 = memref.load %arg4[%c2_92, %c4_93] : memref<3x12xf32, #tpu.memory_space<smem>>
    %191 = vector.broadcast %190 : f32 to vector<16x128xf32>
    %192 = arith.mulf %181, %191 : vector<16x128xf32>
    %193 = arith.addf %157, %192 : vector<16x128xf32>
    %c5 = arith.constant 5 : index
    %c0_94 = arith.constant 0 : index
    %194 = memref.load %arg2[%c5, %c0_94] : memref<12x5xf32, #tpu.memory_space<smem>>
    %195 = vector.broadcast %194 : f32 to vector<16x128xf32>
    %196 = arith.mulf %4, %195 : vector<16x128xf32>
    %c5_95 = arith.constant 5 : index
    %c1_96 = arith.constant 1 : index
    %197 = memref.load %arg2[%c5_95, %c1_96] : memref<12x5xf32, #tpu.memory_space<smem>>
    %198 = vector.broadcast %197 : f32 to vector<16x128xf32>
    %199 = arith.mulf %7, %198 : vector<16x128xf32>
    %200 = arith.addf %196, %199 : vector<16x128xf32>
    %c5_97 = arith.constant 5 : index
    %c2_98 = arith.constant 2 : index
    %201 = memref.load %arg2[%c5_97, %c2_98] : memref<12x5xf32, #tpu.memory_space<smem>>
    %202 = vector.broadcast %201 : f32 to vector<16x128xf32>
    %203 = arith.mulf %10, %202 : vector<16x128xf32>
    %204 = arith.addf %200, %203 : vector<16x128xf32>
    %c5_99 = arith.constant 5 : index
    %c3_100 = arith.constant 3 : index
    %205 = memref.load %arg2[%c5_99, %c3_100] : memref<12x5xf32, #tpu.memory_space<smem>>
    %206 = vector.broadcast %205 : f32 to vector<16x128xf32>
    %207 = arith.mulf %13, %206 : vector<16x128xf32>
    %208 = arith.addf %204, %207 : vector<16x128xf32>
    %c5_101 = arith.constant 5 : index
    %c4_102 = arith.constant 4 : index
    %209 = memref.load %arg2[%c5_101, %c4_102] : memref<12x5xf32, #tpu.memory_space<smem>>
    %210 = vector.broadcast %209 : f32 to vector<16x128xf32>
    %211 = arith.mulf %16, %210 : vector<16x128xf32>
    %212 = arith.addf %208, %211 : vector<16x128xf32>
    %c5_103 = arith.constant 5 : index
    %213 = memref.load %arg3[%c5_103] : memref<12xf32, #tpu.memory_space<smem>>
    %214 = vector.broadcast %213 : f32 to vector<16x128xf32>
    %215 = arith.addf %212, %214 : vector<16x128xf32>
    %cst_104 = arith.constant 0.000000e+00 : f32
    %216 = vector.broadcast %cst_104 : f32 to vector<16x128xf32>
    %217 = arith.maximumf %215, %216 : vector<16x128xf32>
    %c0_105 = arith.constant 0 : index
    %c5_106 = arith.constant 5 : index
    %218 = memref.load %arg4[%c0_105, %c5_106] : memref<3x12xf32, #tpu.memory_space<smem>>
    %219 = vector.broadcast %218 : f32 to vector<16x128xf32>
    %220 = arith.mulf %217, %219 : vector<16x128xf32>
    %221 = arith.addf %185, %220 : vector<16x128xf32>
    %c1_107 = arith.constant 1 : index
    %c5_108 = arith.constant 5 : index
    %222 = memref.load %arg4[%c1_107, %c5_108] : memref<3x12xf32, #tpu.memory_space<smem>>
    %223 = vector.broadcast %222 : f32 to vector<16x128xf32>
    %224 = arith.mulf %217, %223 : vector<16x128xf32>
    %225 = arith.addf %189, %224 : vector<16x128xf32>
    %c2_109 = arith.constant 2 : index
    %c5_110 = arith.constant 5 : index
    %226 = memref.load %arg4[%c2_109, %c5_110] : memref<3x12xf32, #tpu.memory_space<smem>>
    %227 = vector.broadcast %226 : f32 to vector<16x128xf32>
    %228 = arith.mulf %217, %227 : vector<16x128xf32>
    %229 = arith.addf %193, %228 : vector<16x128xf32>
    %c6 = arith.constant 6 : index
    %c0_111 = arith.constant 0 : index
    %230 = memref.load %arg2[%c6, %c0_111] : memref<12x5xf32, #tpu.memory_space<smem>>
    %231 = vector.broadcast %230 : f32 to vector<16x128xf32>
    %232 = arith.mulf %4, %231 : vector<16x128xf32>
    %c6_112 = arith.constant 6 : index
    %c1_113 = arith.constant 1 : index
    %233 = memref.load %arg2[%c6_112, %c1_113] : memref<12x5xf32, #tpu.memory_space<smem>>
    %234 = vector.broadcast %233 : f32 to vector<16x128xf32>
    %235 = arith.mulf %7, %234 : vector<16x128xf32>
    %236 = arith.addf %232, %235 : vector<16x128xf32>
    %c6_114 = arith.constant 6 : index
    %c2_115 = arith.constant 2 : index
    %237 = memref.load %arg2[%c6_114, %c2_115] : memref<12x5xf32, #tpu.memory_space<smem>>
    %238 = vector.broadcast %237 : f32 to vector<16x128xf32>
    %239 = arith.mulf %10, %238 : vector<16x128xf32>
    %240 = arith.addf %236, %239 : vector<16x128xf32>
    %c6_116 = arith.constant 6 : index
    %c3_117 = arith.constant 3 : index
    %241 = memref.load %arg2[%c6_116, %c3_117] : memref<12x5xf32, #tpu.memory_space<smem>>
    %242 = vector.broadcast %241 : f32 to vector<16x128xf32>
    %243 = arith.mulf %13, %242 : vector<16x128xf32>
    %244 = arith.addf %240, %243 : vector<16x128xf32>
    %c6_118 = arith.constant 6 : index
    %c4_119 = arith.constant 4 : index
    %245 = memref.load %arg2[%c6_118, %c4_119] : memref<12x5xf32, #tpu.memory_space<smem>>
    %246 = vector.broadcast %245 : f32 to vector<16x128xf32>
    %247 = arith.mulf %16, %246 : vector<16x128xf32>
    %248 = arith.addf %244, %247 : vector<16x128xf32>
    %c6_120 = arith.constant 6 : index
    %249 = memref.load %arg3[%c6_120] : memref<12xf32, #tpu.memory_space<smem>>
    %250 = vector.broadcast %249 : f32 to vector<16x128xf32>
    %251 = arith.addf %248, %250 : vector<16x128xf32>
    %cst_121 = arith.constant 0.000000e+00 : f32
    %252 = vector.broadcast %cst_121 : f32 to vector<16x128xf32>
    %253 = arith.maximumf %251, %252 : vector<16x128xf32>
    %c0_122 = arith.constant 0 : index
    %c6_123 = arith.constant 6 : index
    %254 = memref.load %arg4[%c0_122, %c6_123] : memref<3x12xf32, #tpu.memory_space<smem>>
    %255 = vector.broadcast %254 : f32 to vector<16x128xf32>
    %256 = arith.mulf %253, %255 : vector<16x128xf32>
    %257 = arith.addf %221, %256 : vector<16x128xf32>
    %c1_124 = arith.constant 1 : index
    %c6_125 = arith.constant 6 : index
    %258 = memref.load %arg4[%c1_124, %c6_125] : memref<3x12xf32, #tpu.memory_space<smem>>
    %259 = vector.broadcast %258 : f32 to vector<16x128xf32>
    %260 = arith.mulf %253, %259 : vector<16x128xf32>
    %261 = arith.addf %225, %260 : vector<16x128xf32>
    %c2_126 = arith.constant 2 : index
    %c6_127 = arith.constant 6 : index
    %262 = memref.load %arg4[%c2_126, %c6_127] : memref<3x12xf32, #tpu.memory_space<smem>>
    %263 = vector.broadcast %262 : f32 to vector<16x128xf32>
    %264 = arith.mulf %253, %263 : vector<16x128xf32>
    %265 = arith.addf %229, %264 : vector<16x128xf32>
    %c7 = arith.constant 7 : index
    %c0_128 = arith.constant 0 : index
    %266 = memref.load %arg2[%c7, %c0_128] : memref<12x5xf32, #tpu.memory_space<smem>>
    %267 = vector.broadcast %266 : f32 to vector<16x128xf32>
    %268 = arith.mulf %4, %267 : vector<16x128xf32>
    %c7_129 = arith.constant 7 : index
    %c1_130 = arith.constant 1 : index
    %269 = memref.load %arg2[%c7_129, %c1_130] : memref<12x5xf32, #tpu.memory_space<smem>>
    %270 = vector.broadcast %269 : f32 to vector<16x128xf32>
    %271 = arith.mulf %7, %270 : vector<16x128xf32>
    %272 = arith.addf %268, %271 : vector<16x128xf32>
    %c7_131 = arith.constant 7 : index
    %c2_132 = arith.constant 2 : index
    %273 = memref.load %arg2[%c7_131, %c2_132] : memref<12x5xf32, #tpu.memory_space<smem>>
    %274 = vector.broadcast %273 : f32 to vector<16x128xf32>
    %275 = arith.mulf %10, %274 : vector<16x128xf32>
    %276 = arith.addf %272, %275 : vector<16x128xf32>
    %c7_133 = arith.constant 7 : index
    %c3_134 = arith.constant 3 : index
    %277 = memref.load %arg2[%c7_133, %c3_134] : memref<12x5xf32, #tpu.memory_space<smem>>
    %278 = vector.broadcast %277 : f32 to vector<16x128xf32>
    %279 = arith.mulf %13, %278 : vector<16x128xf32>
    %280 = arith.addf %276, %279 : vector<16x128xf32>
    %c7_135 = arith.constant 7 : index
    %c4_136 = arith.constant 4 : index
    %281 = memref.load %arg2[%c7_135, %c4_136] : memref<12x5xf32, #tpu.memory_space<smem>>
    %282 = vector.broadcast %281 : f32 to vector<16x128xf32>
    %283 = arith.mulf %16, %282 : vector<16x128xf32>
    %284 = arith.addf %280, %283 : vector<16x128xf32>
    %c7_137 = arith.constant 7 : index
    %285 = memref.load %arg3[%c7_137] : memref<12xf32, #tpu.memory_space<smem>>
    %286 = vector.broadcast %285 : f32 to vector<16x128xf32>
    %287 = arith.addf %284, %286 : vector<16x128xf32>
    %cst_138 = arith.constant 0.000000e+00 : f32
    %288 = vector.broadcast %cst_138 : f32 to vector<16x128xf32>
    %289 = arith.maximumf %287, %288 : vector<16x128xf32>
    %c0_139 = arith.constant 0 : index
    %c7_140 = arith.constant 7 : index
    %290 = memref.load %arg4[%c0_139, %c7_140] : memref<3x12xf32, #tpu.memory_space<smem>>
    %291 = vector.broadcast %290 : f32 to vector<16x128xf32>
    %292 = arith.mulf %289, %291 : vector<16x128xf32>
    %293 = arith.addf %257, %292 : vector<16x128xf32>
    %c1_141 = arith.constant 1 : index
    %c7_142 = arith.constant 7 : index
    %294 = memref.load %arg4[%c1_141, %c7_142] : memref<3x12xf32, #tpu.memory_space<smem>>
    %295 = vector.broadcast %294 : f32 to vector<16x128xf32>
    %296 = arith.mulf %289, %295 : vector<16x128xf32>
    %297 = arith.addf %261, %296 : vector<16x128xf32>
    %c2_143 = arith.constant 2 : index
    %c7_144 = arith.constant 7 : index
    %298 = memref.load %arg4[%c2_143, %c7_144] : memref<3x12xf32, #tpu.memory_space<smem>>
    %299 = vector.broadcast %298 : f32 to vector<16x128xf32>
    %300 = arith.mulf %289, %299 : vector<16x128xf32>
    %301 = arith.addf %265, %300 : vector<16x128xf32>
    %c8 = arith.constant 8 : index
    %c0_145 = arith.constant 0 : index
    %302 = memref.load %arg2[%c8, %c0_145] : memref<12x5xf32, #tpu.memory_space<smem>>
    %303 = vector.broadcast %302 : f32 to vector<16x128xf32>
    %304 = arith.mulf %4, %303 : vector<16x128xf32>
    %c8_146 = arith.constant 8 : index
    %c1_147 = arith.constant 1 : index
    %305 = memref.load %arg2[%c8_146, %c1_147] : memref<12x5xf32, #tpu.memory_space<smem>>
    %306 = vector.broadcast %305 : f32 to vector<16x128xf32>
    %307 = arith.mulf %7, %306 : vector<16x128xf32>
    %308 = arith.addf %304, %307 : vector<16x128xf32>
    %c8_148 = arith.constant 8 : index
    %c2_149 = arith.constant 2 : index
    %309 = memref.load %arg2[%c8_148, %c2_149] : memref<12x5xf32, #tpu.memory_space<smem>>
    %310 = vector.broadcast %309 : f32 to vector<16x128xf32>
    %311 = arith.mulf %10, %310 : vector<16x128xf32>
    %312 = arith.addf %308, %311 : vector<16x128xf32>
    %c8_150 = arith.constant 8 : index
    %c3_151 = arith.constant 3 : index
    %313 = memref.load %arg2[%c8_150, %c3_151] : memref<12x5xf32, #tpu.memory_space<smem>>
    %314 = vector.broadcast %313 : f32 to vector<16x128xf32>
    %315 = arith.mulf %13, %314 : vector<16x128xf32>
    %316 = arith.addf %312, %315 : vector<16x128xf32>
    %c8_152 = arith.constant 8 : index
    %c4_153 = arith.constant 4 : index
    %317 = memref.load %arg2[%c8_152, %c4_153] : memref<12x5xf32, #tpu.memory_space<smem>>
    %318 = vector.broadcast %317 : f32 to vector<16x128xf32>
    %319 = arith.mulf %16, %318 : vector<16x128xf32>
    %320 = arith.addf %316, %319 : vector<16x128xf32>
    %c8_154 = arith.constant 8 : index
    %321 = memref.load %arg3[%c8_154] : memref<12xf32, #tpu.memory_space<smem>>
    %322 = vector.broadcast %321 : f32 to vector<16x128xf32>
    %323 = arith.addf %320, %322 : vector<16x128xf32>
    %cst_155 = arith.constant 0.000000e+00 : f32
    %324 = vector.broadcast %cst_155 : f32 to vector<16x128xf32>
    %325 = arith.maximumf %323, %324 : vector<16x128xf32>
    %c0_156 = arith.constant 0 : index
    %c8_157 = arith.constant 8 : index
    %326 = memref.load %arg4[%c0_156, %c8_157] : memref<3x12xf32, #tpu.memory_space<smem>>
    %327 = vector.broadcast %326 : f32 to vector<16x128xf32>
    %328 = arith.mulf %325, %327 : vector<16x128xf32>
    %329 = arith.addf %293, %328 : vector<16x128xf32>
    %c1_158 = arith.constant 1 : index
    %c8_159 = arith.constant 8 : index
    %330 = memref.load %arg4[%c1_158, %c8_159] : memref<3x12xf32, #tpu.memory_space<smem>>
    %331 = vector.broadcast %330 : f32 to vector<16x128xf32>
    %332 = arith.mulf %325, %331 : vector<16x128xf32>
    %333 = arith.addf %297, %332 : vector<16x128xf32>
    %c2_160 = arith.constant 2 : index
    %c8_161 = arith.constant 8 : index
    %334 = memref.load %arg4[%c2_160, %c8_161] : memref<3x12xf32, #tpu.memory_space<smem>>
    %335 = vector.broadcast %334 : f32 to vector<16x128xf32>
    %336 = arith.mulf %325, %335 : vector<16x128xf32>
    %337 = arith.addf %301, %336 : vector<16x128xf32>
    %c9 = arith.constant 9 : index
    %c0_162 = arith.constant 0 : index
    %338 = memref.load %arg2[%c9, %c0_162] : memref<12x5xf32, #tpu.memory_space<smem>>
    %339 = vector.broadcast %338 : f32 to vector<16x128xf32>
    %340 = arith.mulf %4, %339 : vector<16x128xf32>
    %c9_163 = arith.constant 9 : index
    %c1_164 = arith.constant 1 : index
    %341 = memref.load %arg2[%c9_163, %c1_164] : memref<12x5xf32, #tpu.memory_space<smem>>
    %342 = vector.broadcast %341 : f32 to vector<16x128xf32>
    %343 = arith.mulf %7, %342 : vector<16x128xf32>
    %344 = arith.addf %340, %343 : vector<16x128xf32>
    %c9_165 = arith.constant 9 : index
    %c2_166 = arith.constant 2 : index
    %345 = memref.load %arg2[%c9_165, %c2_166] : memref<12x5xf32, #tpu.memory_space<smem>>
    %346 = vector.broadcast %345 : f32 to vector<16x128xf32>
    %347 = arith.mulf %10, %346 : vector<16x128xf32>
    %348 = arith.addf %344, %347 : vector<16x128xf32>
    %c9_167 = arith.constant 9 : index
    %c3_168 = arith.constant 3 : index
    %349 = memref.load %arg2[%c9_167, %c3_168] : memref<12x5xf32, #tpu.memory_space<smem>>
    %350 = vector.broadcast %349 : f32 to vector<16x128xf32>
    %351 = arith.mulf %13, %350 : vector<16x128xf32>
    %352 = arith.addf %348, %351 : vector<16x128xf32>
    %c9_169 = arith.constant 9 : index
    %c4_170 = arith.constant 4 : index
    %353 = memref.load %arg2[%c9_169, %c4_170] : memref<12x5xf32, #tpu.memory_space<smem>>
    %354 = vector.broadcast %353 : f32 to vector<16x128xf32>
    %355 = arith.mulf %16, %354 : vector<16x128xf32>
    %356 = arith.addf %352, %355 : vector<16x128xf32>
    %c9_171 = arith.constant 9 : index
    %357 = memref.load %arg3[%c9_171] : memref<12xf32, #tpu.memory_space<smem>>
    %358 = vector.broadcast %357 : f32 to vector<16x128xf32>
    %359 = arith.addf %356, %358 : vector<16x128xf32>
    %cst_172 = arith.constant 0.000000e+00 : f32
    %360 = vector.broadcast %cst_172 : f32 to vector<16x128xf32>
    %361 = arith.maximumf %359, %360 : vector<16x128xf32>
    %c0_173 = arith.constant 0 : index
    %c9_174 = arith.constant 9 : index
    %362 = memref.load %arg4[%c0_173, %c9_174] : memref<3x12xf32, #tpu.memory_space<smem>>
    %363 = vector.broadcast %362 : f32 to vector<16x128xf32>
    %364 = arith.mulf %361, %363 : vector<16x128xf32>
    %365 = arith.addf %329, %364 : vector<16x128xf32>
    %c1_175 = arith.constant 1 : index
    %c9_176 = arith.constant 9 : index
    %366 = memref.load %arg4[%c1_175, %c9_176] : memref<3x12xf32, #tpu.memory_space<smem>>
    %367 = vector.broadcast %366 : f32 to vector<16x128xf32>
    %368 = arith.mulf %361, %367 : vector<16x128xf32>
    %369 = arith.addf %333, %368 : vector<16x128xf32>
    %c2_177 = arith.constant 2 : index
    %c9_178 = arith.constant 9 : index
    %370 = memref.load %arg4[%c2_177, %c9_178] : memref<3x12xf32, #tpu.memory_space<smem>>
    %371 = vector.broadcast %370 : f32 to vector<16x128xf32>
    %372 = arith.mulf %361, %371 : vector<16x128xf32>
    %373 = arith.addf %337, %372 : vector<16x128xf32>
    %c10 = arith.constant 10 : index
    %c0_179 = arith.constant 0 : index
    %374 = memref.load %arg2[%c10, %c0_179] : memref<12x5xf32, #tpu.memory_space<smem>>
    %375 = vector.broadcast %374 : f32 to vector<16x128xf32>
    %376 = arith.mulf %4, %375 : vector<16x128xf32>
    %c10_180 = arith.constant 10 : index
    %c1_181 = arith.constant 1 : index
    %377 = memref.load %arg2[%c10_180, %c1_181] : memref<12x5xf32, #tpu.memory_space<smem>>
    %378 = vector.broadcast %377 : f32 to vector<16x128xf32>
    %379 = arith.mulf %7, %378 : vector<16x128xf32>
    %380 = arith.addf %376, %379 : vector<16x128xf32>
    %c10_182 = arith.constant 10 : index
    %c2_183 = arith.constant 2 : index
    %381 = memref.load %arg2[%c10_182, %c2_183] : memref<12x5xf32, #tpu.memory_space<smem>>
    %382 = vector.broadcast %381 : f32 to vector<16x128xf32>
    %383 = arith.mulf %10, %382 : vector<16x128xf32>
    %384 = arith.addf %380, %383 : vector<16x128xf32>
    %c10_184 = arith.constant 10 : index
    %c3_185 = arith.constant 3 : index
    %385 = memref.load %arg2[%c10_184, %c3_185] : memref<12x5xf32, #tpu.memory_space<smem>>
    %386 = vector.broadcast %385 : f32 to vector<16x128xf32>
    %387 = arith.mulf %13, %386 : vector<16x128xf32>
    %388 = arith.addf %384, %387 : vector<16x128xf32>
    %c10_186 = arith.constant 10 : index
    %c4_187 = arith.constant 4 : index
    %389 = memref.load %arg2[%c10_186, %c4_187] : memref<12x5xf32, #tpu.memory_space<smem>>
    %390 = vector.broadcast %389 : f32 to vector<16x128xf32>
    %391 = arith.mulf %16, %390 : vector<16x128xf32>
    %392 = arith.addf %388, %391 : vector<16x128xf32>
    %c10_188 = arith.constant 10 : index
    %393 = memref.load %arg3[%c10_188] : memref<12xf32, #tpu.memory_space<smem>>
    %394 = vector.broadcast %393 : f32 to vector<16x128xf32>
    %395 = arith.addf %392, %394 : vector<16x128xf32>
    %cst_189 = arith.constant 0.000000e+00 : f32
    %396 = vector.broadcast %cst_189 : f32 to vector<16x128xf32>
    %397 = arith.maximumf %395, %396 : vector<16x128xf32>
    %c0_190 = arith.constant 0 : index
    %c10_191 = arith.constant 10 : index
    %398 = memref.load %arg4[%c0_190, %c10_191] : memref<3x12xf32, #tpu.memory_space<smem>>
    %399 = vector.broadcast %398 : f32 to vector<16x128xf32>
    %400 = arith.mulf %397, %399 : vector<16x128xf32>
    %401 = arith.addf %365, %400 : vector<16x128xf32>
    %c1_192 = arith.constant 1 : index
    %c10_193 = arith.constant 10 : index
    %402 = memref.load %arg4[%c1_192, %c10_193] : memref<3x12xf32, #tpu.memory_space<smem>>
    %403 = vector.broadcast %402 : f32 to vector<16x128xf32>
    %404 = arith.mulf %397, %403 : vector<16x128xf32>
    %405 = arith.addf %369, %404 : vector<16x128xf32>
    %c2_194 = arith.constant 2 : index
    %c10_195 = arith.constant 10 : index
    %406 = memref.load %arg4[%c2_194, %c10_195] : memref<3x12xf32, #tpu.memory_space<smem>>
    %407 = vector.broadcast %406 : f32 to vector<16x128xf32>
    %408 = arith.mulf %397, %407 : vector<16x128xf32>
    %409 = arith.addf %373, %408 : vector<16x128xf32>
    %c11 = arith.constant 11 : index
    %c0_196 = arith.constant 0 : index
    %410 = memref.load %arg2[%c11, %c0_196] : memref<12x5xf32, #tpu.memory_space<smem>>
    %411 = vector.broadcast %410 : f32 to vector<16x128xf32>
    %412 = arith.mulf %4, %411 : vector<16x128xf32>
    %c11_197 = arith.constant 11 : index
    %c1_198 = arith.constant 1 : index
    %413 = memref.load %arg2[%c11_197, %c1_198] : memref<12x5xf32, #tpu.memory_space<smem>>
    %414 = vector.broadcast %413 : f32 to vector<16x128xf32>
    %415 = arith.mulf %7, %414 : vector<16x128xf32>
    %416 = arith.addf %412, %415 : vector<16x128xf32>
    %c11_199 = arith.constant 11 : index
    %c2_200 = arith.constant 2 : index
    %417 = memref.load %arg2[%c11_199, %c2_200] : memref<12x5xf32, #tpu.memory_space<smem>>
    %418 = vector.broadcast %417 : f32 to vector<16x128xf32>
    %419 = arith.mulf %10, %418 : vector<16x128xf32>
    %420 = arith.addf %416, %419 : vector<16x128xf32>
    %c11_201 = arith.constant 11 : index
    %c3_202 = arith.constant 3 : index
    %421 = memref.load %arg2[%c11_201, %c3_202] : memref<12x5xf32, #tpu.memory_space<smem>>
    %422 = vector.broadcast %421 : f32 to vector<16x128xf32>
    %423 = arith.mulf %13, %422 : vector<16x128xf32>
    %424 = arith.addf %420, %423 : vector<16x128xf32>
    %c11_203 = arith.constant 11 : index
    %c4_204 = arith.constant 4 : index
    %425 = memref.load %arg2[%c11_203, %c4_204] : memref<12x5xf32, #tpu.memory_space<smem>>
    %426 = vector.broadcast %425 : f32 to vector<16x128xf32>
    %427 = arith.mulf %16, %426 : vector<16x128xf32>
    %428 = arith.addf %424, %427 : vector<16x128xf32>
    %c11_205 = arith.constant 11 : index
    %429 = memref.load %arg3[%c11_205] : memref<12xf32, #tpu.memory_space<smem>>
    %430 = vector.broadcast %429 : f32 to vector<16x128xf32>
    %431 = arith.addf %428, %430 : vector<16x128xf32>
    %cst_206 = arith.constant 0.000000e+00 : f32
    %432 = vector.broadcast %cst_206 : f32 to vector<16x128xf32>
    %433 = arith.maximumf %431, %432 : vector<16x128xf32>
    %c0_207 = arith.constant 0 : index
    %c11_208 = arith.constant 11 : index
    %434 = memref.load %arg4[%c0_207, %c11_208] : memref<3x12xf32, #tpu.memory_space<smem>>
    %435 = vector.broadcast %434 : f32 to vector<16x128xf32>
    %436 = arith.mulf %433, %435 : vector<16x128xf32>
    %437 = arith.addf %401, %436 : vector<16x128xf32>
    %c1_209 = arith.constant 1 : index
    %c11_210 = arith.constant 11 : index
    %438 = memref.load %arg4[%c1_209, %c11_210] : memref<3x12xf32, #tpu.memory_space<smem>>
    %439 = vector.broadcast %438 : f32 to vector<16x128xf32>
    %440 = arith.mulf %433, %439 : vector<16x128xf32>
    %441 = arith.addf %405, %440 : vector<16x128xf32>
    %c2_211 = arith.constant 2 : index
    %c11_212 = arith.constant 11 : index
    %442 = memref.load %arg4[%c2_211, %c11_212] : memref<3x12xf32, #tpu.memory_space<smem>>
    %443 = vector.broadcast %442 : f32 to vector<16x128xf32>
    %444 = arith.mulf %433, %443 : vector<16x128xf32>
    %445 = arith.addf %409, %444 : vector<16x128xf32>
    %c0_213 = arith.constant 0 : index
    %446 = memref.load %arg5[%c0_213] : memref<3xf32, #tpu.memory_space<smem>>
    %447 = vector.broadcast %446 : f32 to vector<16x128xf32>
    %448 = arith.addf %437, %447 : vector<16x128xf32>
    %c0_214 = arith.constant 0 : index
    %449 = arith.index_cast %1 : i32 to index
    %c0_215 = arith.constant 0 : index
    %450 = vector.load %arg6[%c0_214, %449, %c0_215] : memref<3x16x128xf32, #tpu.memory_space<vmem>>, vector<1x16x128xf32>
    %451 = vector.shape_cast %450 : vector<1x16x128xf32> to vector<16x128xf32>
    %452 = vector.shape_cast %448 : vector<16x128xf32> to vector<1x16x128xf32>
    tpu.vector_store %arg6[%c0_214, %449, %c0_215], %452 {strides = array<i32>} : memref<3x16x128xf32, #tpu.memory_space<vmem>>, vector<1x16x128xf32>,
    %c1_216 = arith.constant 1 : index
    %453 = memref.load %arg5[%c1_216] : memref<3xf32, #tpu.memory_space<smem>>
    %454 = vector.broadcast %453 : f32 to vector<16x128xf32>
    %455 = arith.addf %441, %454 : vector<16x128xf32>
    %c1_217 = arith.constant 1 : index
    %456 = arith.index_cast %1 : i32 to index
    %c0_218 = arith.constant 0 : index
    %457 = vector.load %arg6[%c1_217, %456, %c0_218] : memref<3x16x128xf32, #tpu.memory_space<vmem>>, vector<1x16x128xf32>
    %458 = vector.shape_cast %457 : vector<1x16x128xf32> to vector<16x128xf32>
    %459 = vector.shape_cast %455 : vector<16x128xf32> to vector<1x16x128xf32>
    tpu.vector_store %arg6[%c1_217, %456, %c0_218], %459 {strides = array<i32>} : memref<3x16x128xf32, #tpu.memory_space<vmem>>, vector<1x16x128xf32>,
    %c2_219 = arith.constant 2 : index
    %460 = memref.load %arg5[%c2_219] : memref<3xf32, #tpu.memory_space<smem>>
    %461 = vector.broadcast %460 : f32 to vector<16x128xf32>
    %462 = arith.addf %445, %461 : vector<16x128xf32>
    %c2_220 = arith.constant 2 : index
    %463 = arith.index_cast %1 : i32 to index
    %c0_221 = arith.constant 0 : index
    %464 = vector.load %arg6[%c2_220, %463, %c0_221] : memref<3x16x128xf32, #tpu.memory_space<vmem>>, vector<1x16x128xf32>
    %465 = vector.shape_cast %464 : vector<1x16x128xf32> to vector<16x128xf32>
    %466 = vector.shape_cast %462 : vector<16x128xf32> to vector<1x16x128xf32>
    tpu.vector_store %arg6[%c2_220, %463, %c0_221], %466 {strides = array<i32>} : memref<3x16x128xf32, #tpu.memory_space<vmem>>, vector<1x16x128xf32>,
    %c1_i32 = arith.constant 1 : i32
    return
  }
  func.func @transform_0(%arg0: i32) -> (i32, i32, i32) {
    %c0_i32 = arith.constant 0 : i32
    %c0_i32_0 = arith.constant 0 : i32
    %c0_i32_1 = arith.constant 0 : i32
    return %c0_i32, %arg0, %c0_i32_0 : i32, i32, i32
  }
  func.func @transform_1(%arg0: i32) -> (i32, i32) {
    %c0_i32 = arith.constant 0 : i32
    %c0_i32_0 = arith.constant 0 : i32
    %c0_i32_1 = arith.constant 0 : i32
    return %c0_i32, %c0_i32_0 : i32, i32
  }
  func.func @transform_2(%arg0: i32) -> i32 {
    %c0_i32 = arith.constant 0 : i32
    %c0_i32_0 = arith.constant 0 : i32
    return %c0_i32 : i32
  }
  func.func @transform_3(%arg0: i32) -> (i32, i32) {
    %c0_i32 = arith.constant 0 : i32
    %c0_i32_0 = arith.constant 0 : i32
    %c0_i32_1 = arith.constant 0 : i32
    return %c0_i32, %c0_i32_0 : i32, i32
  }
  func.func @transform_4(%arg0: i32) -> i32 {
    %c0_i32 = arith.constant 0 : i32
    %c0_i32_0 = arith.constant 0 : i32
    return %c0_i32 : i32
  }
  func.func @transform_5(%arg0: i32) -> (i32, i32, i32) {
    %c0_i32 = arith.constant 0 : i32
    %c0_i32_0 = arith.constant 0 : i32
    %c0_i32_1 = arith.constant 0 : i32
    return %c0_i32, %arg0, %c0_i32_0 : i32, i32, i32
  }
}

</mosaic_0001>

<llo_original>
// kernel: mlp_5d_forward.1
$region0: #{mlp_5d_forward.1}
  #allocation0 [shape = 'u32[]', space=smem, size = 0x4, offset = 0x4, fixed_abs, tag = 'smem constant byte address 0x4 - core index']
  #allocation1 [shape = 'u32[144,128]{1,0:T(1,128)}', space=vmem, size = 0x12000, scoped, tag = 'internal scratch']
  %s0 = inlined_call_operand.vmem [shape: f32[5,16,128], index: 0, kind: input, shape index: {}]
  %s1 = inlined_call_operand.vmem [shape: f32[12,5], index: 1, kind: input, shape index: {}]
  %s2 = inlined_call_operand.vmem [shape: f32[12], index: 2, kind: input, shape index: {}]
  %s3 = inlined_call_operand.vmem [shape: f32[3,12], index: 3, kind: input, shape index: {}]
  %s4 = inlined_call_operand.vmem [shape: f32[3], index: 4, kind: input, shape index: {}]
  %s5 = inlined_call_operand.vmem [shape: f32[3,16,128], index: 5, kind: output, shape index: {}]
  %s6 = sld [smem:[#allocation0]]
  $region46: #{mlp_5d_forward.1} parent=0
    _
  %s8 = ssub.s32 1, %s6
  %s9 = scalar_select 0, %s8, %s6
  $region1: #{mlp_5d_forward.1} parent=0
    #allocation2 [shape = 'u8[8192]{0}', space=smem, size = 0x2000, scoped, tag = 'input window, operand 1, single buffered']
    #allocation3 [shape = 's32[1]{0}', space=sflag, size = 0x4, scoped, tag = 'scoped memory for mlp_5d_forward.1']
    #allocation4 [shape = 'u8[512]{0}', space=smem, size = 0x200, scoped, tag = 'input window, operand 2, single buffered']
    #allocation5 [shape = 's32[1]{0}', space=sflag, size = 0x4, scoped, tag = 'scoped memory for mlp_5d_forward.1']
    #allocation6 [shape = 'u8[2048]{0}', space=smem, size = 0x800, scoped, tag = 'input window, operand 3, single buffered']
    #allocation7 [shape = 'u8[512]{0}', space=smem, size = 0x200, scoped, tag = 'input window, operand 4, single buffered']
    #allocation8 [shape = 's32[1]{0}', space=sflag, size = 0x4, scoped, tag = 'scoped memory for mlp_5d_forward.1']
    %10 = vsyncpa [#allocation3], 0
    %11 = vsyncpa [#allocation5], 0
    %12 = vsyncpa [#allocation8], 0
    // Predicated region
    $region2: #{mlp_5d_forward.1} parent=1 // pred_check
      _
    $region3: #{mlp_5d_forward.1} parent=1 // pred_check_branch
      %14 = sbr.rel (0) target = $region5
    $region4: #{mlp_5d_forward.1} parent=1 // pred_region
      _
    $region5: #{mlp_5d_forward.1} parent=1 // pred_fallthru
      _
    // Predicated region
    $region6: #{mlp_5d_forward.1} parent=1 // pred_check
      _
    $region7: #{mlp_5d_forward.1} parent=1 // pred_check_branch
      %16 = sbr.rel (0) target = $region9
    $region8: #{mlp_5d_forward.1} parent=1 // pred_region
      %s18 = ssub.s32 256, 256
      %19 = vsyncadd [#allocation3], %s18
      %s20 = sshll.u32 %s1, 4
      %s21 = int_to_ptr.vmem [resolvable:$true] %s20
      %26 = dma.vmem_to_smem %s21, 256, [#allocation2], [#allocation3], 128, 128, 8
    $region9: #{mlp_5d_forward.1} parent=1 // pred_fallthru
      _
    // Predicated region
    $region10: #{mlp_5d_forward.1} parent=1 // pred_check
      _
    $region11: #{mlp_5d_forward.1} parent=1 // pred_check_branch
      %28 = sbr.rel (0) target = $region13
    $region12: #{mlp_5d_forward.1} parent=1 // pred_region
      %s30 = ssub.s32 16, 16
      %31 = vsyncadd [#allocation5], %s30
      %s33 = sshll.u32 %s2, 4
      %s34 = int_to_ptr.vmem [resolvable:$true] %s33
      %36 = dma.vmem_to_smem %s34, 16, [#allocation4], [#allocation5]
    $region13: #{mlp_5d_forward.1} parent=1 // pred_fallthru
      _
    // Predicated region
    $region14: #{mlp_5d_forward.1} parent=1 // pred_check
      _
    $region15: #{mlp_5d_forward.1} parent=1 // pred_check_branch
      %38 = sbr.rel (0) target = $region17
    $region16: #{mlp_5d_forward.1} parent=1 // pred_region
      %s40 = ssub.s32 64, 64
      %41 = vsyncadd [#allocation5], %s40
      %s43 = sshll.u32 %s3, 4
      %s44 = int_to_ptr.vmem [resolvable:$true] %s43
      %46 = dma.vmem_to_smem %s44, 64, [#allocation6], [#allocation5]
    $region17: #{mlp_5d_forward.1} parent=1 // pred_fallthru
      _
    // Predicated region
    $region18: #{mlp_5d_forward.1} parent=1 // pred_check
      _
    $region19: #{mlp_5d_forward.1} parent=1 // pred_check_branch
      %48 = sbr.rel (0) target = $region21
    $region20: #{mlp_5d_forward.1} parent=1 // pred_region
      %s50 = ssub.s32 16, 16
      %51 = vsyncadd [#allocation8], %s50
      %s53 = sshll.u32 %s4, 4
      %s54 = int_to_ptr.vmem [resolvable:$true] %s53
      %56 = dma.vmem_to_smem %s54, 16, [#allocation7], [#allocation8]
    $region21: #{mlp_5d_forward.1} parent=1 // pred_fallthru
      _
    // Predicated region
    $region22: #{mlp_5d_forward.1} parent=1 // pred_check
      _
    $region23: #{mlp_5d_forward.1} parent=1 // pred_check_branch
      %58 = sbr.rel (0) target = $region25
    $region24: #{mlp_5d_forward.1} parent=1 // pred_region
      %59 = dma.done [#allocation3], 256
    $region25: #{mlp_5d_forward.1} parent=1 // pred_fallthru
      _
    // Predicated region
    $region26: #{mlp_5d_forward.1} parent=1 // pred_check
      _
    $region27: #{mlp_5d_forward.1} parent=1 // pred_check_branch
      %61 = sbr.rel (0) target = $region29
    $region28: #{mlp_5d_forward.1} parent=1 // pred_region
      %62 = dma.done [#allocation5], 16
    $region29: #{mlp_5d_forward.1} parent=1 // pred_fallthru
      _
    // Predicated region
    $region30: #{mlp_5d_forward.1} parent=1 // pred_check
      _
    $region31: #{mlp_5d_forward.1} parent=1 // pred_check_branch
      %64 = sbr.rel (0) target = $region33
    $region32: #{mlp_5d_forward.1} parent=1 // pred_region
      %65 = dma.done [#allocation5], 64
    $region33: #{mlp_5d_forward.1} parent=1 // pred_fallthru
      _
    // Predicated region
    $region34: #{mlp_5d_forward.1} parent=1 // pred_check
      _
    $region35: #{mlp_5d_forward.1} parent=1 // pred_check_branch
      %67 = sbr.rel (0) target = $region37
    $region36: #{mlp_5d_forward.1} parent=1 // pred_region
      %68 = dma.done [#allocation8], 16
    $region37: #{mlp_5d_forward.1} parent=1 // pred_fallthru
      _
    %69 = sfence
    %v70 = vld [vmem:[%s0] sm:$0xff]
    %v71 = vld [vmem:[%s0 + $0x8] sm:$0xff]
    %s72 = sadd.s32 0, 16
    %s73 = scalar_lea.vmem %s0, %s72
    %v74 = vld [vmem:[%s73] sm:$0xff]
    %v75 = vld [vmem:[%s73 + $0x8] sm:$0xff]
    %s76 = sadd.s32 0, 32
    %s77 = scalar_lea.vmem %s0, %s76
    %v78 = vld [vmem:[%s77] sm:$0xff]
    %v79 = vld [vmem:[%s77 + $0x8] sm:$0xff]
    %s80 = sadd.s32 0, 48
    %s81 = scalar_lea.vmem %s0, %s80
    %v82 = vld [vmem:[%s81] sm:$0xff]
    %v83 = vld [vmem:[%s81 + $0x8] sm:$0xff]
    %s84 = sadd.s32 0, 64
    %s85 = scalar_lea.vmem %s0, %s84
    %v86 = vld [vmem:[%s85] sm:$0xff]
    %v87 = vld [vmem:[%s85 + $0x8] sm:$0xff]
    %s88 = sld [smem:[#allocation2]]
    %v89 = vstv %s88
    %v90 = vmul.f32 %v70, %v89
    %v91 = vmul.f32 %v71, %v89
    %s92 = sld [smem:[#allocation2 + $0x1]]
    %v93 = vstv %s92
    %v94 = vmul.f32 %v74, %v93
    %v95 = vmul.f32 %v75, %v93
    %v96 = vadd.f32 %v90, %v94
    %v97 = vadd.f32 %v91, %v95
    %s98 = sld [smem:[#allocation2 + $0x2]]
    %v99 = vstv %s98
    %v100 = vmul.f32 %v78, %v99
    %v101 = vmul.f32 %v79, %v99
    %v102 = vadd.f32 %v96, %v100
    %v103 = vadd.f32 %v97, %v101
    %s104 = sld [smem:[#allocation2 + $0x3]]
    %v105 = vstv %s104
    %v106 = vmul.f32 %v82, %v105
    %v107 = vmul.f32 %v83, %v105
    %v108 = vadd.f32 %v102, %v106
    %v109 = vadd.f32 %v103, %v107
    %s110 = sld [smem:[#allocation2 + $0x4]]
    %v111 = vstv %s110
    %v112 = vmul.f32 %v86, %v111
    %v113 = vmul.f32 %v87, %v111
    %v114 = vadd.f32 %v108, %v112
    %v115 = vadd.f32 %v109, %v113
    %s116 = sld [smem:[#allocation4]]
    %v117 = vstv %s116
    %v118 = vadd.f32 %v114, %v117
    %v119 = vadd.f32 %v115, %v117
    %v120 = vmax.f32 %v118, 0.0
    %v121 = vmax.f32 %v119, 0.0
    %s122 = sld [smem:[#allocation6]]
    %v123 = vstv %s122
    %v124 = vmul.f32 %v120, %v123
    %v125 = vmul.f32 %v121, %v123
    %s126 = sld [smem:[#allocation6 + $0x80]]
    %v127 = vstv %s126
    %v128 = vmul.f32 %v120, %v127
    %v129 = vmul.f32 %v121, %v127
    %s130 = sld [smem:[#allocation6 + $0x100]]
    %v131 = vstv %s130
    %v132 = vmul.f32 %v120, %v131
    %v133 = vmul.f32 %v121, %v131
    %s134 = sld [smem:[#allocation2 + $0x80]]
    %v135 = vstv %s134
    %v136 = vmul.f32 %v70, %v135
    %v137 = vmul.f32 %v71, %v135
    %s138 = sld [smem:[#allocation2 + $0x81]]
    %v139 = vstv %s138
    %v140 = vmul.f32 %v74, %v139
    %v141 = vmul.f32 %v75, %v139
    %v142 = vadd.f32 %v136, %v140
    %v143 = vadd.f32 %v137, %v141
    %s144 = sld [smem:[#allocation2 + $0x82]]
    %v145 = vstv %s144
    %v146 = vmul.f32 %v78, %v145
    %v147 = vmul.f32 %v79, %v145
    %v148 = vadd.f32 %v142, %v146
    %v149 = vadd.f32 %v143, %v147
    %s150 = sld [smem:[#allocation2 + $0x83]]
    %v151 = vstv %s150
    %v152 = vmul.f32 %v82, %v151
    %v153 = vmul.f32 %v83, %v151
    %v154 = vadd.f32 %v148, %v152
    %v155 = vadd.f32 %v149, %v153
    %s156 = sld [smem:[#allocation2 + $0x84]]
    %v157 = vstv %s156
    %v158 = vmul.f32 %v86, %v157
    %v159 = vmul.f32 %v87, %v157
    %v160 = vadd.f32 %v154, %v158
    %v161 = vadd.f32 %v155, %v159
    %s162 = sld [smem:[#allocation4 + $0x1]]
    %v163 = vstv %s162
    %v164 = vadd.f32 %v160, %v163
    %v165 = vadd.f32 %v161, %v163
    %v166 = vmax.f32 %v164, 0.0
    %v167 = vmax.f32 %v165, 0.0
    %s168 = sld [smem:[#allocation6 + $0x1]]
    %v169 = vstv %s168
    %v170 = vmul.f32 %v166, %v169
    %v171 = vmul.f32 %v167, %v169
    %v172 = vadd.f32 %v124, %v170
    %v173 = vadd.f32 %v125, %v171
    %s174 = sld [smem:[#allocation6 + $0x81]]
    %v175 = vstv %s174
    %v176 = vmul.f32 %v166, %v175
    %v177 = vmul.f32 %v167, %v175
    %v178 = vadd.f32 %v128, %v176
    %v179 = vadd.f32 %v129, %v177
    %s180 = sld [smem:[#allocation6 + $0x101]]
    %v181 = vstv %s180
    %v182 = vmul.f32 %v166, %v181
    %v183 = vmul.f32 %v167, %v181
    %v184 = vadd.f32 %v132, %v182
    %v185 = vadd.f32 %v133, %v183
    %s186 = sld [smem:[#allocation2 + $0x100]]
    %v187 = vstv %s186
    %v188 = vmul.f32 %v70, %v187
    %v189 = vmul.f32 %v71, %v187
    %s190 = sld [smem:[#allocation2 + $0x101]]
    %v191 = vstv %s190
    %v192 = vmul.f32 %v74, %v191
    %v193 = vmul.f32 %v75, %v191
    %v194 = vadd.f32 %v188, %v192
    %v195 = vadd.f32 %v189, %v193
    %s196 = sld [smem:[#allocation2 + $0x102]]
    %v197 = vstv %s196
    %v198 = vmul.f32 %v78, %v197
    %v199 = vmul.f32 %v79, %v197
    %v200 = vadd.f32 %v194, %v198
    %v201 = vadd.f32 %v195, %v199
    %s202 = sld [smem:[#allocation2 + $0x103]]
    %v203 = vstv %s202
    %v204 = vmul.f32 %v82, %v203
    %v205 = vmul.f32 %v83, %v203
    %v206 = vadd.f32 %v200, %v204
    %v207 = vadd.f32 %v201, %v205
    %s208 = sld [smem:[#allocation2 + $0x104]]
    %v209 = vstv %s208
    %v210 = vmul.f32 %v86, %v209
    %v211 = vmul.f32 %v87, %v209
    %v212 = vadd.f32 %v206, %v210
    %v213 = vadd.f32 %v207, %v211
    %s214 = sld [smem:[#allocation4 + $0x2]]
    %v215 = vstv %s214
    %v216 = vadd.f32 %v212, %v215
    %v217 = vadd.f32 %v213, %v215
    %v218 = vmax.f32 %v216, 0.0
    %v219 = vmax.f32 %v217, 0.0
    %s220 = sld [smem:[#allocation6 + $0x2]]
    %v221 = vstv %s220
    %v222 = vmul.f32 %v218, %v221
    %v223 = vmul.f32 %v219, %v221
    %v224 = vadd.f32 %v172, %v222
    %v225 = vadd.f32 %v173, %v223
    %s226 = sld [smem:[#allocation6 + $0x82]]
    %v227 = vstv %s226
    %v228 = vmul.f32 %v218, %v227
    %v229 = vmul.f32 %v219, %v227
    %v230 = vadd.f32 %v178, %v228
    %v231 = vadd.f32 %v179, %v229
    %s232 = sld [smem:[#allocation6 + $0x102]]
    %v233 = vstv %s232
    %v234 = vmul.f32 %v218, %v233
    %v235 = vmul.f32 %v219, %v233
    %v236 = vadd.f32 %v184, %v234
    %v237 = vadd.f32 %v185, %v235
    %s238 = sld [smem:[#allocation2 + $0x180]]
    %v239 = vstv %s238
    %v240 = vmul.f32 %v70, %v239
    %v241 = vmul.f32 %v71, %v239
    %s242 = sld [smem:[#allocation2 + $0x181]]
    %v243 = vstv %s242
    %v244 = vmul.f32 %v74, %v243
    %v245 = vmul.f32 %v75, %v243
    %v246 = vadd.f32 %v240, %v244
    %v247 = vadd.f32 %v241, %v245
    %s248 = sld [smem:[#allocation2 + $0x182]]
    %v249 = vstv %s248
    %v250 = vmul.f32 %v78, %v249
    %v251 = vmul.f32 %v79, %v249
    %v252 = vadd.f32 %v246, %v250
    %v253 = vadd.f32 %v247, %v251
    %s254 = sld [smem:[#allocation2 + $0x183]]
    %v255 = vstv %s254
    %v256 = vmul.f32 %v82, %v255
    %v257 = vmul.f32 %v83, %v255
    %v258 = vadd.f32 %v252, %v256
    %v259 = vadd.f32 %v253, %v257
    %s260 = sld [smem:[#allocation2 + $0x184]]
    %v261 = vstv %s260
    %v262 = vmul.f32 %v86, %v261
    %v263 = vmul.f32 %v87, %v261
    %v264 = vadd.f32 %v258, %v262
    %v265 = vadd.f32 %v259, %v263
    %s266 = sld [smem:[#allocation4 + $0x3]]
    %v267 = vstv %s266
    %v268 = vadd.f32 %v264, %v267
    %v269 = vadd.f32 %v265, %v267
    %v270 = vmax.f32 %v268, 0.0
    %v271 = vmax.f32 %v269, 0.0
    %s272 = sld [smem:[#allocation6 + $0x3]]
    %v273 = vstv %s272
    %v274 = vmul.f32 %v270, %v273
    %v275 = vmul.f32 %v271, %v273
    %v276 = vadd.f32 %v224, %v274
    %v277 = vadd.f32 %v225, %v275
    %s278 = sld [smem:[#allocation6 + $0x83]]
    %v279 = vstv %s278
    %v280 = vmul.f32 %v270, %v279
    %v281 = vmul.f32 %v271, %v279
    %v282 = vadd.f32 %v230, %v280
    %v283 = vadd.f32 %v231, %v281
    %s284 = sld [smem:[#allocation6 + $0x103]]
    %v285 = vstv %s284
    %v286 = vmul.f32 %v270, %v285
    %v287 = vmul.f32 %v271, %v285
    %v288 = vadd.f32 %v236, %v286
    %v289 = vadd.f32 %v237, %v287
    %s290 = sld [smem:[#allocation2 + $0x200]]
    %v291 = vstv %s290
    %v292 = vmul.f32 %v70, %v291
    %v293 = vmul.f32 %v71, %v291
    %s294 = sld [smem:[#allocation2 + $0x201]]
    %v295 = vstv %s294
    %v296 = vmul.f32 %v74, %v295
    %v297 = vmul.f32 %v75, %v295
    %v298 = vadd.f32 %v292, %v296
    %v299 = vadd.f32 %v293, %v297
    %s300 = sld [smem:[#allocation2 + $0x202]]
    %v301 = vstv %s300
    %v302 = vmul.f32 %v78, %v301
    %v303 = vmul.f32 %v79, %v301
    %v304 = vadd.f32 %v298, %v302
    %v305 = vadd.f32 %v299, %v303
    %s306 = sld [smem:[#allocation2 + $0x203]]
    %v307 = vstv %s306
    %v308 = vmul.f32 %v82, %v307
    %v309 = vmul.f32 %v83, %v307
    %v310 = vadd.f32 %v304, %v308
    %v311 = vadd.f32 %v305, %v309
    %s312 = sld [smem:[#allocation2 + $0x204]]
    %v313 = vstv %s312
    %v314 = vmul.f32 %v86, %v313
    %v315 = vmul.f32 %v87, %v313
    %v316 = vadd.f32 %v310, %v314
    %v317 = vadd.f32 %v311, %v315
    %s318 = sld [smem:[#allocation4 + $0x4]]
    %v319 = vstv %s318
    %v320 = vadd.f32 %v316, %v319
    %v321 = vadd.f32 %v317, %v319
    %v322 = vmax.f32 %v320, 0.0
    %v323 = vmax.f32 %v321, 0.0
    %s324 = sld [smem:[#allocation6 + $0x4]]
    %v325 = vstv %s324
    %v326 = vmul.f32 %v322, %v325
    %v327 = vmul.f32 %v323, %v325
    %v328 = vadd.f32 %v276, %v326
    %v329 = vadd.f32 %v277, %v327
    %s330 = sld [smem:[#allocation6 + $0x84]]
    %v331 = vstv %s330
    %v332 = vmul.f32 %v322, %v331
    %v333 = vmul.f32 %v323, %v331
    %v334 = vadd.f32 %v282, %v332
    %v335 = vadd.f32 %v283, %v333
    %s336 = sld [smem:[#allocation6 + $0x104]]
    %v337 = vstv %s336
    %v338 = vmul.f32 %v322, %v337
    %v339 = vmul.f32 %v323, %v337
    %v340 = vadd.f32 %v288, %v338
    %v341 = vadd.f32 %v289, %v339
    %s342 = sld [smem:[#allocation2 + $0x280]]
    %v343 = vstv %s342
    %v344 = vmul.f32 %v70, %v343
    %v345 = vmul.f32 %v71, %v343
    %s346 = sld [smem:[#allocation2 + $0x281]]
    %v347 = vstv %s346
    %v348 = vmul.f32 %v74, %v347
    %v349 = vmul.f32 %v75, %v347
    %v350 = vadd.f32 %v344, %v348
    %v351 = vadd.f32 %v345, %v349
    %s352 = sld [smem:[#allocation2 + $0x282]]
    %v353 = vstv %s352
    %v354 = vmul.f32 %v78, %v353
    %v355 = vmul.f32 %v79, %v353
    %v356 = vadd.f32 %v350, %v354
    %v357 = vadd.f32 %v351, %v355
    %s358 = sld [smem:[#allocation2 + $0x283]]
    %v359 = vstv %s358
    %v360 = vmul.f32 %v82, %v359
    %v361 = vmul.f32 %v83, %v359
    %v362 = vadd.f32 %v356, %v360
    %v363 = vadd.f32 %v357, %v361
    %s364 = sld [smem:[#allocation2 + $0x284]]
    %v365 = vstv %s364
    %v366 = vmul.f32 %v86, %v365
    %v367 = vmul.f32 %v87, %v365
    %v368 = vadd.f32 %v362, %v366
    %v369 = vadd.f32 %v363, %v367
    %s370 = sld [smem:[#allocation4 + $0x5]]
    %v371 = vstv %s370
    %v372 = vadd.f32 %v368, %v371
    %v373 = vadd.f32 %v369, %v371
    %v374 = vmax.f32 %v372, 0.0
    %v375 = vmax.f32 %v373, 0.0
    %s376 = sld [smem:[#allocation6 + $0x5]]
    %v377 = vstv %s376
    %v378 = vmul.f32 %v374, %v377
    %v379 = vmul.f32 %v375, %v377
    %v380 = vadd.f32 %v328, %v378
    %v381 = vadd.f32 %v329, %v379
    %s382 = sld [smem:[#allocation6 + $0x85]]
    %v383 = vstv %s382
    %v384 = vmul.f32 %v374, %v383
    %v385 = vmul.f32 %v375, %v383
    %v386 = vadd.f32 %v334, %v384
    %v387 = vadd.f32 %v335, %v385
    %s388 = sld [smem:[#allocation6 + $0x105]]
    %v389 = vstv %s388
    %v390 = vmul.f32 %v374, %v389
    %v391 = vmul.f32 %v375, %v389
    %v392 = vadd.f32 %v340, %v390
    %v393 = vadd.f32 %v341, %v391
    %s394 = sld [smem:[#allocation2 + $0x300]]
    %v395 = vstv %s394
    %v396 = vmul.f32 %v70, %v395
    %v397 = vmul.f32 %v71, %v395
    %s398 = sld [smem:[#allocation2 + $0x301]]
    %v399 = vstv %s398
    %v400 = vmul.f32 %v74, %v399
    %v401 = vmul.f32 %v75, %v399
    %v402 = vadd.f32 %v396, %v400
    %v403 = vadd.f32 %v397, %v401
    %s404 = sld [smem:[#allocation2 + $0x302]]
    %v405 = vstv %s404
    %v406 = vmul.f32 %v78, %v405
    %v407 = vmul.f32 %v79, %v405
    %v408 = vadd.f32 %v402, %v406
    %v409 = vadd.f32 %v403, %v407
    %s410 = sld [smem:[#allocation2 + $0x303]]
    %v411 = vstv %s410
    %v412 = vmul.f32 %v82, %v411
    %v413 = vmul.f32 %v83, %v411
    %v414 = vadd.f32 %v408, %v412
    %v415 = vadd.f32 %v409, %v413
    %s416 = sld [smem:[#allocation2 + $0x304]]
    %v417 = vstv %s416
    %v418 = vmul.f32 %v86, %v417
    %v419 = vmul.f32 %v87, %v417
    %v420 = vadd.f32 %v414, %v418
    %v421 = vadd.f32 %v415, %v419
    %s422 = sld [smem:[#allocation4 + $0x6]]
    %v423 = vstv %s422
    %v424 = vadd.f32 %v420, %v423
    %v425 = vadd.f32 %v421, %v423
    %v426 = vmax.f32 %v424, 0.0
    %v427 = vmax.f32 %v425, 0.0
    %s428 = sld [smem:[#allocation6 + $0x6]]
    %v429 = vstv %s428
    %v430 = vmul.f32 %v426, %v429
    %v431 = vmul.f32 %v427, %v429
    %v432 = vadd.f32 %v380, %v430
    %v433 = vadd.f32 %v381, %v431
    %s434 = sld [smem:[#allocation6 + $0x86]]
    %v435 = vstv %s434
    %v436 = vmul.f32 %v426, %v435
    %v437 = vmul.f32 %v427, %v435
    %v438 = vadd.f32 %v386, %v436
    %v439 = vadd.f32 %v387, %v437
    %s440 = sld [smem:[#allocation6 + $0x106]]
    %v441 = vstv %s440
    %v442 = vmul.f32 %v426, %v441
    %v443 = vmul.f32 %v427, %v441
    %v444 = vadd.f32 %v392, %v442
    %v445 = vadd.f32 %v393, %v443
    %s446 = sld [smem:[#allocation2 + $0x380]]
    %v447 = vstv %s446
    %v448 = vmul.f32 %v70, %v447
    %v449 = vmul.f32 %v71, %v447
    %s450 = sld [smem:[#allocation2 + $0x381]]
    %v451 = vstv %s450
    %v452 = vmul.f32 %v74, %v451
    %v453 = vmul.f32 %v75, %v451
    %v454 = vadd.f32 %v448, %v452
    %v455 = vadd.f32 %v449, %v453
    %s456 = sld [smem:[#allocation2 + $0x382]]
    %v457 = vstv %s456
    %v458 = vmul.f32 %v78, %v457
    %v459 = vmul.f32 %v79, %v457
    %v460 = vadd.f32 %v454, %v458
    %v461 = vadd.f32 %v455, %v459
    %s462 = sld [smem:[#allocation2 + $0x383]]
    %v463 = vstv %s462
    %v464 = vmul.f32 %v82, %v463
    %v465 = vmul.f32 %v83, %v463
    %v466 = vadd.f32 %v460, %v464
    %v467 = vadd.f32 %v461, %v465
    %s468 = sld [smem:[#allocation2 + $0x384]]
    %v469 = vstv %s468
    %v470 = vmul.f32 %v86, %v469
    %v471 = vmul.f32 %v87, %v469
    %v472 = vadd.f32 %v466, %v470
    %v473 = vadd.f32 %v467, %v471
    %s474 = sld [smem:[#allocation4 + $0x7]]
    %v475 = vstv %s474
    %v476 = vadd.f32 %v472, %v475
    %v477 = vadd.f32 %v473, %v475
    %v478 = vmax.f32 %v476, 0.0
    %v479 = vmax.f32 %v477, 0.0
    %s480 = sld [smem:[#allocation6 + $0x7]]
    %v481 = vstv %s480
    %v482 = vmul.f32 %v478, %v481
    %v483 = vmul.f32 %v479, %v481
    %v484 = vadd.f32 %v432, %v482
    %v485 = vadd.f32 %v433, %v483
    %s486 = sld [smem:[#allocation6 + $0x87]]
    %v487 = vstv %s486
    %v488 = vmul.f32 %v478, %v487
    %v489 = vmul.f32 %v479, %v487
    %v490 = vadd.f32 %v438, %v488
    %v491 = vadd.f32 %v439, %v489
    %s492 = sld [smem:[#allocation6 + $0x107]]
    %v493 = vstv %s492
    %v494 = vmul.f32 %v478, %v493
    %v495 = vmul.f32 %v479, %v493
    %v496 = vadd.f32 %v444, %v494
    %v497 = vadd.f32 %v445, %v495
    %s498 = sld [smem:[#allocation2 + $0x400]]
    %v499 = vstv %s498
    %v500 = vmul.f32 %v70, %v499
    %v501 = vmul.f32 %v71, %v499
    %s502 = sld [smem:[#allocation2 + $0x401]]
    %v503 = vstv %s502
    %v504 = vmul.f32 %v74, %v503
    %v505 = vmul.f32 %v75, %v503
    %v506 = vadd.f32 %v500, %v504
    %v507 = vadd.f32 %v501, %v505
    %s508 = sld [smem:[#allocation2 + $0x402]]
    %v509 = vstv %s508
    %v510 = vmul.f32 %v78, %v509
    %v511 = vmul.f32 %v79, %v509
    %v512 = vadd.f32 %v506, %v510
    %v513 = vadd.f32 %v507, %v511
    %s514 = sld [smem:[#allocation2 + $0x403]]
    %v515 = vstv %s514
    %v516 = vmul.f32 %v82, %v515
    %v517 = vmul.f32 %v83, %v515
    %v518 = vadd.f32 %v512, %v516
    %v519 = vadd.f32 %v513, %v517
    %s520 = sld [smem:[#allocation2 + $0x404]]
    %v521 = vstv %s520
    %v522 = vmul.f32 %v86, %v521
    %v523 = vmul.f32 %v87, %v521
    %v524 = vadd.f32 %v518, %v522
    %v525 = vadd.f32 %v519, %v523
    %s526 = sld [smem:[#allocation4 + $0x8]]
    %v527 = vstv %s526
    %v528 = vadd.f32 %v524, %v527
    %v529 = vadd.f32 %v525, %v527
    %v530 = vmax.f32 %v528, 0.0
    %v531 = vmax.f32 %v529, 0.0
    %s532 = sld [smem:[#allocation6 + $0x8]]
    %v533 = vstv %s532
    %v534 = vmul.f32 %v530, %v533
    %v535 = vmul.f32 %v531, %v533
    %v536 = vadd.f32 %v484, %v534
    %v537 = vadd.f32 %v485, %v535
    %s538 = sld [smem:[#allocation6 + $0x88]]
    %v539 = vstv %s538
    %v540 = vmul.f32 %v530, %v539
    %v541 = vmul.f32 %v531, %v539
    %v542 = vadd.f32 %v490, %v540
    %v543 = vadd.f32 %v491, %v541
    %s544 = sld [smem:[#allocation6 + $0x108]]
    %v545 = vstv %s544
    %v546 = vmul.f32 %v530, %v545
    %v547 = vmul.f32 %v531, %v545
    %v548 = vadd.f32 %v496, %v546
    %v549 = vadd.f32 %v497, %v547
    %s550 = sld [smem:[#allocation2 + $0x480]]
    %v551 = vstv %s550
    %v552 = vmul.f32 %v70, %v551
    %v553 = vmul.f32 %v71, %v551
    %s554 = sld [smem:[#allocation2 + $0x481]]
    %v555 = vstv %s554
    %v556 = vmul.f32 %v74, %v555
    %v557 = vmul.f32 %v75, %v555
    %v558 = vadd.f32 %v552, %v556
    %v559 = vadd.f32 %v553, %v557
    %s560 = sld [smem:[#allocation2 + $0x482]]
    %v561 = vstv %s560
    %v562 = vmul.f32 %v78, %v561
    %v563 = vmul.f32 %v79, %v561
    %v564 = vadd.f32 %v558, %v562
    %v565 = vadd.f32 %v559, %v563
    %s566 = sld [smem:[#allocation2 + $0x483]]
    %v567 = vstv %s566
    %v568 = vmul.f32 %v82, %v567
    %v569 = vmul.f32 %v83, %v567
    %v570 = vadd.f32 %v564, %v568
    %v571 = vadd.f32 %v565, %v569
    %s572 = sld [smem:[#allocation2 + $0x484]]
    %v573 = vstv %s572
    %v574 = vmul.f32 %v86, %v573
    %v575 = vmul.f32 %v87, %v573
    %v576 = vadd.f32 %v570, %v574
    %v577 = vadd.f32 %v571, %v575
    %s578 = sld [smem:[#allocation4 + $0x9]]
    %v579 = vstv %s578
    %v580 = vadd.f32 %v576, %v579
    %v581 = vadd.f32 %v577, %v579
    %v582 = vmax.f32 %v580, 0.0
    %v583 = vmax.f32 %v581, 0.0
    %s584 = sld [smem:[#allocation6 + $0x9]]
    %v585 = vstv %s584
    %v586 = vmul.f32 %v582, %v585
    %v587 = vmul.f32 %v583, %v585
    %v588 = vadd.f32 %v536, %v586
    %v589 = vadd.f32 %v537, %v587
    %s590 = sld [smem:[#allocation6 + $0x89]]
    %v591 = vstv %s590
    %v592 = vmul.f32 %v582, %v591
    %v593 = vmul.f32 %v583, %v591
    %v594 = vadd.f32 %v542, %v592
    %v595 = vadd.f32 %v543, %v593
    %s596 = sld [smem:[#allocation6 + $0x109]]
    %v597 = vstv %s596
    %v598 = vmul.f32 %v582, %v597
    %v599 = vmul.f32 %v583, %v597
    %v600 = vadd.f32 %v548, %v598
    %v601 = vadd.f32 %v549, %v599
    %s602 = sld [smem:[#allocation2 + $0x500]]
    %v603 = vstv %s602
    %v604 = vmul.f32 %v70, %v603
    %v605 = vmul.f32 %v71, %v603
    %s606 = sld [smem:[#allocation2 + $0x501]]
    %v607 = vstv %s606
    %v608 = vmul.f32 %v74, %v607
    %v609 = vmul.f32 %v75, %v607
    %v610 = vadd.f32 %v604, %v608
    %v611 = vadd.f32 %v605, %v609
    %s612 = sld [smem:[#allocation2 + $0x502]]
    %v613 = vstv %s612
    %v614 = vmul.f32 %v78, %v613
    %v615 = vmul.f32 %v79, %v613
    %v616 = vadd.f32 %v610, %v614
    %v617 = vadd.f32 %v611, %v615
    %s618 = sld [smem:[#allocation2 + $0x503]]
    %v619 = vstv %s618
    %v620 = vmul.f32 %v82, %v619
    %v621 = vmul.f32 %v83, %v619
    %v622 = vadd.f32 %v616, %v620
    %v623 = vadd.f32 %v617, %v621
    %s624 = sld [smem:[#allocation2 + $0x504]]
    %v625 = vstv %s624
    %v626 = vmul.f32 %v86, %v625
    %v627 = vmul.f32 %v87, %v625
    %v628 = vadd.f32 %v622, %v626
    %v629 = vadd.f32 %v623, %v627
    %s630 = sld [smem:[#allocation4 + $0xa]]
    %v631 = vstv %s630
    %v632 = vadd.f32 %v628, %v631
    %v633 = vadd.f32 %v629, %v631
    %v634 = vmax.f32 %v632, 0.0
    %v635 = vmax.f32 %v633, 0.0
    %s636 = sld [smem:[#allocation6 + $0xa]]
    %v637 = vstv %s636
    %v638 = vmul.f32 %v634, %v637
    %v639 = vmul.f32 %v635, %v637
    %v640 = vadd.f32 %v588, %v638
    %v641 = vadd.f32 %v589, %v639
    %s642 = sld [smem:[#allocation6 + $0x8a]]
    %v643 = vstv %s642
    %v644 = vmul.f32 %v634, %v643
    %v645 = vmul.f32 %v635, %v643
    %v646 = vadd.f32 %v594, %v644
    %v647 = vadd.f32 %v595, %v645
    %s648 = sld [smem:[#allocation6 + $0x10a]]
    %v649 = vstv %s648
    %v650 = vmul.f32 %v634, %v649
    %v651 = vmul.f32 %v635, %v649
    %v652 = vadd.f32 %v600, %v650
    %v653 = vadd.f32 %v601, %v651
    %s654 = sld [smem:[#allocation2 + $0x580]]
    %v655 = vstv %s654
    %v656 = vmul.f32 %v70, %v655
    %v657 = vmul.f32 %v71, %v655
    %s658 = sld [smem:[#allocation2 + $0x581]]
    %v659 = vstv %s658
    %v660 = vmul.f32 %v74, %v659
    %v661 = vmul.f32 %v75, %v659
    %v662 = vadd.f32 %v656, %v660
    %v663 = vadd.f32 %v657, %v661
    %s664 = sld [smem:[#allocation2 + $0x582]]
    %v665 = vstv %s664
    %v666 = vmul.f32 %v78, %v665
    %v667 = vmul.f32 %v79, %v665
    %v668 = vadd.f32 %v662, %v666
    %v669 = vadd.f32 %v663, %v667
    %s670 = sld [smem:[#allocation2 + $0x583]]
    %v671 = vstv %s670
    %v672 = vmul.f32 %v82, %v671
    %v673 = vmul.f32 %v83, %v671
    %v674 = vadd.f32 %v668, %v672
    %v675 = vadd.f32 %v669, %v673
    %s676 = sld [smem:[#allocation2 + $0x584]]
    %v677 = vstv %s676
    %v678 = vmul.f32 %v86, %v677
    %v679 = vmul.f32 %v87, %v677
    %v680 = vadd.f32 %v674, %v678
    %v681 = vadd.f32 %v675, %v679
    %s682 = sld [smem:[#allocation4 + $0xb]]
    %v683 = vstv %s682
    %v684 = vadd.f32 %v680, %v683
    %v685 = vadd.f32 %v681, %v683
    %v686 = vmax.f32 %v684, 0.0
    %v687 = vmax.f32 %v685, 0.0
    %s688 = sld [smem:[#allocation6 + $0xb]]
    %v689 = vstv %s688
    %v690 = vmul.f32 %v686, %v689
    %v691 = vmul.f32 %v687, %v689
    %v692 = vadd.f32 %v640, %v690
    %v693 = vadd.f32 %v641, %v691
    %s694 = sld [smem:[#allocation6 + $0x8b]]
    %v695 = vstv %s694
    %v696 = vmul.f32 %v686, %v695
    %v697 = vmul.f32 %v687, %v695
    %v698 = vadd.f32 %v646, %v696
    %v699 = vadd.f32 %v647, %v697
    %s700 = sld [smem:[#allocation6 + $0x10b]]
    %v701 = vstv %s700
    %v702 = vmul.f32 %v686, %v701
    %v703 = vmul.f32 %v687, %v701
    %v704 = vadd.f32 %v652, %v702
    %v705 = vadd.f32 %v653, %v703
    %s706 = sld [smem:[#allocation7]]
    %v707 = vstv %s706
    %v708 = vadd.f32 %v692, %v707
    %v709 = vadd.f32 %v693, %v707
    %710 = vst [vmem:[%s5] sm:$0xff] %v708
    %711 = vst [vmem:[%s5 + $0x8] sm:$0xff] %v709
    %s712 = sld [smem:[#allocation7 + $0x1]]
    %v713 = vstv %s712
    %v714 = vadd.f32 %v698, %v713
    %v715 = vadd.f32 %v699, %v713
    %s716 = scalar_lea.vmem %s5, %s72
    %717 = vst [vmem:[%s716] sm:$0xff] %v714
    %718 = vst [vmem:[%s716 + $0x8] sm:$0xff] %v715
    %s719 = sld [smem:[#allocation7 + $0x2]]
    %v720 = vstv %s719
    %v721 = vadd.f32 %v704, %v720
    %v722 = vadd.f32 %v705, %v720
    %s723 = scalar_lea.vmem %s5, %s76
    %724 = vst [vmem:[%s723] sm:$0xff] %v721
    %725 = vst [vmem:[%s723 + $0x8] sm:$0xff] %v722
    // Predicated region
    $region38: #{mlp_5d_forward.1} parent=1 // pred_check
      _
    $region39: #{mlp_5d_forward.1} parent=1 // pred_check_branch
      %727 = sbr.rel (0) target = $region41
    $region40: #{mlp_5d_forward.1} parent=1 // pred_region
      _
    $region41: #{mlp_5d_forward.1} parent=1 // pred_fallthru
      _
    // Predicated region
    $region42: #{mlp_5d_forward.1} parent=1 // pred_check
      _
    $region43: #{mlp_5d_forward.1} parent=1 // pred_check_branch
      %729 = sbr.rel (0) target = $region45
    $region44: #{mlp_5d_forward.1} parent=1 // pred_region
      _
    $region45: #{mlp_5d_forward.1} parent=1 // pred_fallthru
      _
    %730 = vsyncpa [#allocation3], 1
    %731 = vsyncpa [#allocation5], 1
    %732 = vsyncpa [#allocation8], 1

</llo_original>
